<compile_context>
chip_gen: v5e
topology: v5e:2x2
jax: 0.10.0
libtpu: 0.0.40
codegen_flags: <defaults>
</compile_context>

<pallas_src>
import functools
from typing import NamedTuple

import jax
import jax.numpy as jnp
from jax.experimental import pallas as pl
from jax.experimental.pallas import tpu as pltpu


def _round_up(x, m):
    return (x + m - 1) // m * m


class PreparedParams(NamedTuple):
    w1t: jax.Array   # [K_pad, H_pad] bf16 (pre-transposed, zero-padded)
    b1:  jax.Array   # [1, H_pad]     f32
    w2t: jax.Array   # [H_pad, V_pad] bf16 (pre-transposed, zero-padded)
    b2:  jax.Array   # [1, V_pad]     f32


def prepare_params(w1, b1, w2, b2, *, block_n=2048):
    """One-time weight preprocessing (transpose + pad + bf16 cast).

    Run ONCE per model, outside the per-step forward: for a large vocab the
    w2 transpose/cast is a full HBM->HBM pass that can cost more than the
    kernel itself if repeated every call.

    Zero padding is mathematically exact: padded x columns are 0, padded w1
    rows/cols are 0, padded hidden units get bias 0 -> ReLU(0)=0 -> multiplied
    by zero rows of w2; padded vocab columns are sliced away in the wrapper.
    """
    H, K = w1.shape            # nn.Linear layout: (out_features, in_features)
    V = w2.shape[0]
    bf16, f32 = jnp.bfloat16, jnp.float32

    K_pad = _round_up(K, 128)                      # 1500 -> 1536
    H_pad = _round_up(H, 128)                      # 300  -> 384
    V_pad = _round_up(V, 128)
    tn = min(block_n, V_pad)
    V_pad = _round_up(V_pad, tn)                   # vocab tiles divide exactly

    w1t = jnp.zeros((K_pad, H_pad), bf16).at[:K, :H].set(w1.T.astype(bf16))
    b1p = jnp.zeros((1, H_pad), f32).at[0, :H].set(b1.astype(f32))
    w2t = jnp.zeros((H_pad, V_pad), bf16).at[:H, :V].set(w2.T.astype(bf16))
    b2p = jnp.zeros((1, V_pad), f32).at[0, :V].set(b2.astype(f32))
    return PreparedParams(w1t, b1p, w2t, b2p)


def _hidden_kernel(x_ref, w1_ref, b1_ref, h_ref):
    # bf16 x bf16 -> f32 accumulation on the MXU; bias + ReLU in f32 on the
    # VPU (v5e has no bf16 VPU path).  h is cast to bf16 exactly once here.
    acc = jnp.dot(x_ref[...], w1_ref[...], preferred_element_type=jnp.float32)
    h_ref[...] = jnp.maximum(acc + b1_ref[...], 0.0).astype(h_ref.dtype)


def _logits_kernel(h_ref, w2_ref, b2_ref, out_ref):
    # h is already bf16 (no per-vocab-tile re-cast).  f32 accumulation, bias
    # add in f32, store in out dtype (bf16 by default -> half the HBM writes).
    acc = jnp.dot(h_ref[...], w2_ref[...], preferred_element_type=jnp.float32)
    out_ref[...] = (acc + b2_ref[...]).astype(out_ref.dtype)


@functools.partial(
    jax.jit, static_argnames=("vocab_size", "block_m", "block_n", "out_dtype"))
def neural_language_model_forward(x, params, vocab_size, *,
                                  block_m=256, block_n=2048,
                                  out_dtype=jnp.bfloat16):
    """Forward pass (returns logits, no softmax -- matches PyTorch forward).

    x:      [B, 1500] float32
    params: PreparedParams from prepare_params()
    """
    B, K = x.shape
    K_pad, H_pad = params.w1t.shape
    V_pad = params.w2t.shape[1]
    V = vocab_size
    bf16 = jnp.bfloat16

    # Batch tile: multiple of 16 so bf16 vregs (16 sublanes) are fully packed.
    tm = min(_round_up(block_m, 16), _round_up(B, 16))
    B_pad = _round_up(B, tm)

    tn = min(block_n, V_pad)
    assert V_pad % tn == 0, "prepare_params must be built with the same block_n"
    n_vocab_tiles = V_pad // tn
    n_batch_tiles = B_pad // tm
    out_bytes = jnp.dtype(out_dtype).itemsize

    # Cheap per-call padding of the activations only (weights already padded).
    x_p = jnp.zeros((B_pad, K_pad), bf16).at[:B, :K].set(x.astype(bf16))

    # ---- Kernel 1: h = ReLU(x @ w1 + b1), computed once per batch tile -----
    hidden_cost = pl.CostEstimate(
        flops=2 * B_pad * K_pad * H_pad,
        transcendentals=0,
        bytes_accessed=(B_pad * K_pad * 2 + K_pad * H_pad * 2
                        + H_pad * 4 + B_pad * H_pad * 2),
    )
    h = pl.pallas_call(
        _hidden_kernel,
        out_shape=jax.ShapeDtypeStruct((B_pad, H_pad), bf16),
        grid=(n_batch_tiles,),
        in_specs=[
            pl.BlockSpec((tm, K_pad), lambda i: (i, 0)),     # x batch tile
            pl.BlockSpec((K_pad, H_pad), lambda i: (0, 0)),  # w1: VMEM-resident
            pl.BlockSpec((1, H_pad), lambda i: (0, 0)),      # b1: VMEM-resident
        ],
        out_specs=pl.BlockSpec((tm, H_pad), lambda i: (i, 0)),
        compiler_params=pltpu.CompilerParams(
            dimension_semantics=("parallel",),
        ),
        cost_estimate=hidden_cost,
    )(x_p, params.w1t, params.b1)

    # ---- Kernel 2: logits = h @ w2 + b2 -------------------------------------
    # Grid is vocab-OUTER / batch-inner: the w2 block index depends only on the
    # outer axis, so each w2 tile is fetched from HBM exactly once; only the
    # tiny bf16 h tile (tm x H_pad) is re-read per vocab tile.  Both axes are
    # independent -> both "parallel" (megacore shards the vocab axis even when
    # there is a single batch tile).
    logits_cost = pl.CostEstimate(
        flops=2 * B_pad * H_pad * V_pad,
        transcendentals=0,
        bytes_accessed=(B_pad * H_pad * 2 * n_vocab_tiles   # h re-reads (tiny)
                        + H_pad * V_pad * 2                 # w2 streamed once
                        + V_pad * 4                         # b2
                        + B_pad * V_pad * out_bytes),       # logits write
    )
    # VMEM budget (double-buffered).  Default tiles stay well under the 32 MiB
    # scoped default (and v7x's 64 MiB physical); only set vmem_limit_bytes if
    # a user-chosen tile config exceeds it.
    step_bytes = 2 * (tm * H_pad * 2 + H_pad * tn * 2 + tn * 4 + tm * tn * out_bytes)
    vmem_limit = int(step_bytes + (4 << 20)) if step_bytes > (30 << 20) else None

    logits_p = pl.pallas_call(
        _logits_kernel,
        out_shape=jax.ShapeDtypeStruct((B_pad, V_pad), out_dtype),
        grid=(n_vocab_tiles, n_batch_tiles),
        in_specs=[
            pl.BlockSpec((tm, H_pad), lambda v, b: (b, 0)),  # h batch tile
            pl.BlockSpec((H_pad, tn), lambda v, b: (0, v)),  # w2 vocab tile (fetched once)
            pl.BlockSpec((1, tn), lambda v, b: (0, v)),      # b2 vocab tile
        ],
        out_specs=pl.BlockSpec((tm, tn), lambda v, b: (b, v)),  # lane-dense out tile
        compiler_params=pltpu.CompilerParams(
            dimension_semantics=("parallel", "parallel"),
            vmem_limit_bytes=vmem_limit,
        ),
        cost_estimate=logits_cost,
    )(h, params.w2t, params.b2)

    return logits_p[:B, :V]


if __name__ == "__main__":
    key = jax.random.PRNGKey(0)
    B = 8            # small batch
    IN = 300 * 5     # = 1500, fixed by the module
    HID = 300        # fixed by the module
    VOCAB = 128      # small vocab_size for the example

    k_x, k_w1, k_b1, k_w2, k_b2 = jax.random.split(key, 5)

    # Deterministic synthetic parameters (nn.Linear layout: weight (out, in)).
    x = jax.random.normal(k_x, (B, IN), dtype=jnp.float32)
    w1 = jax.random.normal(k_w1, (HID, IN), dtype=jnp.float32) * 0.02
    b1 = jax.random.normal(k_b1, (HID,), dtype=jnp.float32) * 0.02
    w2 = jax.random.normal(k_w2, (VOCAB, HID), dtype=jnp.float32) * 0.02
    b2 = jax.random.normal(k_b2, (VOCAB,), dtype=jnp.float32) * 0.02

    # One-time weight preprocessing (transpose/pad/bf16) -- NOT per forward call.
    params = prepare_params(w1, b1, w2, b2)
    params = jax.tree_util.tree_map(jax.block_until_ready, params)

    out = neural_language_model_forward(x, params, VOCAB)
    out = jax.block_until_ready(out)
    assert out.shape == (B, VOCAB)
    assert out.dtype == jnp.bfloat16
    out_f32 = out.astype(jnp.float32)
    # NOTE: if a downstream softmax/loss consumes these bf16 logits, compute it
    # in f32 to avoid precision loss on large-magnitude logits.

    # Reference using the same bf16-weight / f32-accumulation recipe.
    xb, w1b, w2b = (a.astype(jnp.bfloat16) for a in (x, w1, w2))
    h_ref = jnp.maximum(
        jnp.dot(xb, w1b.T, preferred_element_type=jnp.float32) + b1, 0.0)
    ref = jnp.dot(h_ref.astype(jnp.bfloat16), w2b.T,
                  preferred_element_type=jnp.float32) + b2
    assert jnp.allclose(out_f32, ref, atol=2e-2, rtol=2e-2), "mismatch vs bf16 reference"

    # Sanity check vs. the full-f32 PyTorch-equivalent forward (bf16 tolerance).
    ref_f32 = jnp.maximum(x @ w1.T + b1, 0.0) @ w2.T + b2
    assert jnp.allclose(out_f32, ref_f32, atol=5e-2, rtol=5e-2), "mismatch vs f32 reference"

    print("KERNEL_OK")
</pallas_src>

<mosaic_0001>
module attributes {stable_mosaic.version = 11 : i64} {
  func.func @_hidden_kernel(%arg0: i32, %arg1: memref<16x1536xbf16, #tpu.memory_space<vmem>>, %arg2: memref<1536x384xbf16, #tpu.memory_space<vmem>>, %arg3: memref<1x384xf32, #tpu.memory_space<vmem>>, %arg4: memref<16x384xbf16, #tpu.memory_space<vmem>>) attributes {dimension_semantics = [#tpu.dimension_semantics<parallel>], iteration_bounds = array<i64: 1>, scalar_prefetch = 0 : i64, scratch_operands = 0 : i64, tpu.core_type = #tpu.core_type<tc>, window_params = [{transform_indices = @transform_0, window_bounds = array<i64: 16, 1536>}, {pipeline_mode = #tpu.pipeline_mode<synchronous>, transform_indices = @transform_1, window_bounds = array<i64: 1536, 384>}, {pipeline_mode = #tpu.pipeline_mode<synchronous>, transform_indices = @transform_2, window_bounds = array<i64: 1, 384>}, {transform_indices = @transform_3, window_bounds = array<i64: 16, 384>}]} {
    %c0 = arith.constant 0 : index
    %c0_0 = arith.constant 0 : index
    %0 = vector.load %arg1[%c0, %c0_0] : memref<16x1536xbf16, #tpu.memory_space<vmem>>, vector<16x1536xbf16>
    %c0_1 = arith.constant 0 : index
    %c0_2 = arith.constant 0 : index
    %1 = vector.load %arg2[%c0_1, %c0_2] : memref<1536x384xbf16, #tpu.memory_space<vmem>>, vector<1536x384xbf16>
    %cst = arith.constant dense<0.000000e+00> : vector<16x384xf32>
    %2 = tpu.matmul %0, %1, %cst {dimension_numbers = #tpu.dot_dimension_numbers<[1], [0], [0], [1], [0, 0, 1, 1], [], []>} : vector<16x1536xbf16>, vector<1536x384xbf16>, vector<16x384xf32> -> vector<16x384xf32>
    %c0_3 = arith.constant 0 : index
    %c0_4 = arith.constant 0 : index
    %3 = vector.load %arg3[%c0_3, %c0_4] : memref<1x384xf32, #tpu.memory_space<vmem>>, vector<1x384xf32>
    %4 = vector.broadcast %3 : vector<1x384xf32> to vector<16x384xf32>
    %5 = arith.addf %2, %4 : vector<16x384xf32>
    %cst_5 = arith.constant 0.000000e+00 : f32
    %6 = vector.broadcast %cst_5 : f32 to vector<16x384xf32>
    %7 = arith.maximumf %5, %6 : vector<16x384xf32>
    %8 = arith.truncf %7 : vector<16x384xf32> to vector<16x384xbf16>
    %c0_6 = arith.constant 0 : index
    %c0_7 = arith.constant 0 : index
    %9 = vector.load %arg4[%c0_6, %c0_7] : memref<16x384xbf16, #tpu.memory_space<vmem>>, vector<16x384xbf16>
    tpu.vector_store %arg4[%c0_6, %c0_7], %8 {strides = array<i32>} : memref<16x384xbf16, #tpu.memory_space<vmem>>, vector<16x384xbf16>,
    return
  }
  func.func @transform_0(%arg0: i32) -> (i32, i32) {
    %c0_i32 = arith.constant 0 : i32
    %c0_i32_0 = arith.constant 0 : i32
    return %arg0, %c0_i32 : i32, i32
  }
  func.func @transform_1(%arg0: i32) -> (i32, i32) {
    %c0_i32 = arith.constant 0 : i32
    %c0_i32_0 = arith.constant 0 : i32
    %c0_i32_1 = arith.constant 0 : i32
    return %c0_i32, %c0_i32_0 : i32, i32
  }
  func.func @transform_2(%arg0: i32) -> (i32, i32) {
    %c0_i32 = arith.constant 0 : i32
    %c0_i32_0 = arith.constant 0 : i32
    %c0_i32_1 = arith.constant 0 : i32
    return %c0_i32, %c0_i32_0 : i32, i32
  }
  func.func @transform_3(%arg0: i32) -> (i32, i32) {
    %c0_i32 = arith.constant 0 : i32
    %c0_i32_0 = arith.constant 0 : i32
    return %arg0, %c0_i32 : i32, i32
  }
}

module attributes {stable_mosaic.version = 11 : i64} {
  func.func @_logits_kernel(%arg0: i32, %arg1: i32, %arg2: memref<16x384xbf16, #tpu.memory_space<vmem>>, %arg3: memref<384x128xbf16, #tpu.memory_space<vmem>>, %arg4: memref<1x128xf32, #tpu.memory_space<vmem>>, %arg5: memref<16x128xbf16, #tpu.memory_space<vmem>>) attributes {dimension_semantics = [#tpu.dimension_semantics<parallel>, #tpu.dimension_semantics<parallel>], iteration_bounds = array<i64: 1, 1>, scalar_prefetch = 0 : i64, scratch_operands = 0 : i64, tpu.core_type = #tpu.core_type<tc>, window_params = [{transform_indices = @transform_0, window_bounds = array<i64: 16, 384>}, {transform_indices = @transform_1, window_bounds = array<i64: 384, 128>}, {transform_indices = @transform_2, window_bounds = array<i64: 1, 128>}, {transform_indices = @transform_3, window_bounds = array<i64: 16, 128>}]} {
    %c0 = arith.constant 0 : index
    %c0_0 = arith.constant 0 : index
    %0 = vector.load %arg2[%c0, %c0_0] : memref<16x384xbf16, #tpu.memory_space<vmem>>, vector<16x384xbf16>
    %c0_1 = arith.constant 0 : index
    %c0_2 = arith.constant 0 : index
    %1 = vector.load %arg3[%c0_1, %c0_2] : memref<384x128xbf16, #tpu.memory_space<vmem>>, vector<384x128xbf16>
    %cst = arith.constant dense<0.000000e+00> : vector<16x128xf32>
    %2 = tpu.matmul %0, %1, %cst {dimension_numbers = #tpu.dot_dimension_numbers<[1], [0], [0], [1], [0, 0, 1, 1], [], []>} : vector<16x384xbf16>, vector<384x128xbf16>, vector<16x128xf32> -> vector<16x128xf32>
    %c0_3 = arith.constant 0 : index
    %c0_4 = arith.constant 0 : index
    %3 = vector.load %arg4[%c0_3, %c0_4] : memref<1x128xf32, #tpu.memory_space<vmem>>, vector<1x128xf32>
    %4 = vector.broadcast %3 : vector<1x128xf32> to vector<16x128xf32>
    %5 = arith.addf %2, %4 : vector<16x128xf32>
    %6 = arith.truncf %5 : vector<16x128xf32> to vector<16x128xbf16>
    %c0_5 = arith.constant 0 : index
    %c0_6 = arith.constant 0 : index
    %7 = vector.load %arg5[%c0_5, %c0_6] : memref<16x128xbf16, #tpu.memory_space<vmem>>, vector<16x128xbf16>
    tpu.vector_store %arg5[%c0_5, %c0_6], %6 {strides = array<i32>} : memref<16x128xbf16, #tpu.memory_space<vmem>>, vector<16x128xbf16>,
    return
  }
  func.func @transform_0(%arg0: i32, %arg1: i32) -> (i32, i32) {
    %c0_i32 = arith.constant 0 : i32
    %c0_i32_0 = arith.constant 0 : i32
    return %arg1, %c0_i32 : i32, i32
  }
  func.func @transform_1(%arg0: i32, %arg1: i32) -> (i32, i32) {
    %c0_i32 = arith.constant 0 : i32
    %c0_i32_0 = arith.constant 0 : i32
    return %c0_i32, %arg0 : i32, i32
  }
  func.func @transform_2(%arg0: i32, %arg1: i32) -> (i32, i32) {
    %c0_i32 = arith.constant 0 : i32
    %c0_i32_0 = arith.constant 0 : i32
    return %c0_i32, %arg0 : i32, i32
  }
  func.func @transform_3(%arg0: i32, %arg1: i32) -> (i32, i32) {
    %c0_i32 = arith.constant 0 : i32
    return %arg1, %arg0 : i32, i32
  }
}

</mosaic_0001>

<llo_original>
// kernel: neural_language_model_forward.3
$region0: #{neural_language_model_forward.3}
  #allocation0 [shape = 'u32[]', space=smem, size = 0x4, offset = 0x4, fixed_abs, tag = 'smem constant byte address 0x4 - core index']
  #allocation1 [shape = 'u32[72,128]{1,0:T(1,128)}', space=vmem, size = 0x9000, scoped, tag = 'internal scratch']
  %s0 = inlined_call_operand.vmem [shape: bf16[16,384], index: 0, kind: input, shape index: {}]
  %s1 = inlined_call_operand.vmem [shape: bf16[384,128], index: 1, kind: input, shape index: {}]
  %s2 = inlined_call_operand.vmem [shape: f32[1,128], index: 2, kind: input, shape index: {}]
  %s3 = inlined_call_operand.vmem [shape: bf16[16,128], index: 3, kind: output, shape index: {}]
  %s4 = sld [smem:[#allocation0]]
  $region22: #{neural_language_model_forward.3} parent=0
    _
  %s6 = ssub.s32 1, %s4
  %s7 = scalar_select 0, %s6, %s4
  // Predicated region
  $region2: #{neural_language_model_forward.3} parent=0 // pred_check
    _
  $region3: #{neural_language_model_forward.3} parent=0 // pred_check_branch
    %9 = sbr.rel (0) target = $region5
  $region4: #{neural_language_model_forward.3} parent=0 // pred_region
    _
  $region5: #{neural_language_model_forward.3} parent=0 // pred_fallthru
    _
  // Predicated region
  $region6: #{neural_language_model_forward.3} parent=0 // pred_check
    _
  $region7: #{neural_language_model_forward.3} parent=0 // pred_check_branch
    %11 = sbr.rel (0) target = $region9
  $region8: #{neural_language_model_forward.3} parent=0 // pred_region
    _
  $region9: #{neural_language_model_forward.3} parent=0 // pred_fallthru
    _
  // Predicated region
  $region10: #{neural_language_model_forward.3} parent=0 // pred_check
    _
  $region11: #{neural_language_model_forward.3} parent=0 // pred_check_branch
    %13 = sbr.rel (0) target = $region13
  $region12: #{neural_language_model_forward.3} parent=0 // pred_region
    _
  $region13: #{neural_language_model_forward.3} parent=0 // pred_fallthru
    _
  %v14 = vld [vmem:[%s0] sm:$0xff]
  %v15 = vld [vmem:[%s0 + $0x8] sm:$0xf]
  %v16 = vld [vmem:[%s0 + $0xc] sm:$0xff]
  %v17 = vld [vmem:[%s0 + $0x14] sm:$0xf]
  %v18 = vld [vmem:[%s1] sm:$0xf]
  %v19 = vld [vmem:[%s1 + $0x4] sm:$0xf]
  %v20 = vld [vmem:[%s1 + $0x8] sm:$0xf]
  %v21 = vld [vmem:[%s1 + $0xc] sm:$0xf]
  %v22 = vld [vmem:[%s1 + $0x10] sm:$0xf]
  %v23 = vld [vmem:[%s1 + $0x14] sm:$0xf]
  %v24 = vld [vmem:[%s1 + $0x18] sm:$0xf]
  %v25 = vld [vmem:[%s1 + $0x1c] sm:$0xf]
  %v26 = vld [vmem:[%s1 + $0x20] sm:$0xf]
  %v27 = vld [vmem:[%s1 + $0x24] sm:$0xf]
  %v28 = vld [vmem:[%s1 + $0x28] sm:$0xf]
  %v29 = vld [vmem:[%s1 + $0x2c] sm:$0xf]
  %v30 = vld [vmem:[%s1 + $0x30] sm:$0xf]
  %v31 = vld [vmem:[%s1 + $0x34] sm:$0xf]
  %v32 = vld [vmem:[%s1 + $0x38] sm:$0xf]
  %v33 = vld [vmem:[%s1 + $0x3c] sm:$0xf]
  %v34 = vld [vmem:[%s1 + $0x40] sm:$0xf]
  %v35 = vld [vmem:[%s1 + $0x44] sm:$0xf]
  %v36 = vld [vmem:[%s1 + $0x48] sm:$0xf]
  %v37 = vld [vmem:[%s1 + $0x4c] sm:$0xf]
  %v38 = vld [vmem:[%s1 + $0x50] sm:$0xf]
  %v39 = vld [vmem:[%s1 + $0x54] sm:$0xf]
  %v40 = vld [vmem:[%s1 + $0x58] sm:$0xf]
  %v41 = vld [vmem:[%s1 + $0x5c] sm:$0xf]
  %v42 = vld [vmem:[%s1 + $0x60] sm:$0xf]
  %v43 = vld [vmem:[%s1 + $0x64] sm:$0xf]
  %v44 = vld [vmem:[%s1 + $0x68] sm:$0xf]
  %v45 = vld [vmem:[%s1 + $0x6c] sm:$0xf]
  %v46 = vld [vmem:[%s1 + $0x70] sm:$0xf]
  %v47 = vld [vmem:[%s1 + $0x74] sm:$0xf]
  %v48 = vld [vmem:[%s1 + $0x78] sm:$0xf]
  %v49 = vld [vmem:[%s1 + $0x7c] sm:$0xf]
  %v50 = vld [vmem:[%s1 + $0x80] sm:$0xf]
  %v51 = vld [vmem:[%s1 + $0x84] sm:$0xf]
  %v52 = vld [vmem:[%s1 + $0x88] sm:$0xf]
  %v53 = vld [vmem:[%s1 + $0x8c] sm:$0xf]
  %v54 = vld [vmem:[%s1 + $0x90] sm:$0xf]
  %v55 = vld [vmem:[%s1 + $0x94] sm:$0xf]
  %v56 = vld [vmem:[%s1 + $0x98] sm:$0xf]
  %v57 = vld [vmem:[%s1 + $0x9c] sm:$0xf]
  %v58 = vld [vmem:[%s1 + $0xa0] sm:$0xf]
  %v59 = vld [vmem:[%s1 + $0xa4] sm:$0xf]
  %v60 = vld [vmem:[%s1 + $0xa8] sm:$0xf]
  %v61 = vld [vmem:[%s1 + $0xac] sm:$0xf]
  %v62 = vld [vmem:[%s1 + $0xb0] sm:$0xf]
  %v63 = vld [vmem:[%s1 + $0xb4] sm:$0xf]
  %v64 = vld [vmem:[%s1 + $0xb8] sm:$0xf]
  %v65 = vld [vmem:[%s1 + $0xbc] sm:$0xf]
  %v66 = vld [vmem:[%s2] sm:$0x1]
  %v68 = vperm.slane %v66, 0
  %v74 = vunpack.c.l.b16 %v14
  %v75 = vunpack.c.h.b16 %v14
  %v76 = vunpack.c.l.b16 %v15
  %v77 = vunpack.c.l.b16 %v16
  %v78 = vunpack.c.h.b16 %v16
  %v79 = vunpack.c.l.b16 %v17
  %v80 = vpack.c.b16 %v77, %v74
  %v81 = vpack.c.b16 %v78, %v75
  %v82 = vpack.c.b16 %v79, %v76
  %v134 = vunpack.c.l.b16 %v18
  %v135 = vunpack.c.l.b16 %v19
  %v136 = vunpack.c.l.b16 %v20
  %v137 = vunpack.c.l.b16 %v21
  %v138 = vunpack.c.l.b16 %v22
  %v139 = vunpack.c.l.b16 %v23
  %v140 = vunpack.c.l.b16 %v24
  %v141 = vunpack.c.l.b16 %v25
  %v142 = vunpack.c.l.b16 %v26
  %v143 = vunpack.c.l.b16 %v27
  %v144 = vunpack.c.l.b16 %v28
  %v145 = vunpack.c.l.b16 %v29
  %v146 = vunpack.c.l.b16 %v30
  %v147 = vunpack.c.l.b16 %v31
  %v148 = vunpack.c.l.b16 %v32
  %v149 = vunpack.c.l.b16 %v33
  %v150 = vunpack.c.l.b16 %v34
  %v151 = vunpack.c.l.b16 %v35
  %v152 = vunpack.c.l.b16 %v36
  %v153 = vunpack.c.l.b16 %v37
  %v154 = vunpack.c.l.b16 %v38
  %v155 = vunpack.c.l.b16 %v39
  %v156 = vunpack.c.l.b16 %v40
  %v157 = vunpack.c.l.b16 %v41
  %v158 = vunpack.c.l.b16 %v42
  %v159 = vunpack.c.l.b16 %v43
  %v160 = vunpack.c.l.b16 %v44
  %v161 = vunpack.c.l.b16 %v45
  %v162 = vunpack.c.l.b16 %v46
  %v163 = vunpack.c.l.b16 %v47
  %v164 = vunpack.c.l.b16 %v48
  %v165 = vunpack.c.l.b16 %v49
  %v166 = vunpack.c.l.b16 %v50
  %v167 = vunpack.c.l.b16 %v51
  %v168 = vunpack.c.l.b16 %v52
  %v169 = vunpack.c.l.b16 %v53
  %v170 = vunpack.c.l.b16 %v54
  %v171 = vunpack.c.l.b16 %v55
  %v172 = vunpack.c.l.b16 %v56
  %v173 = vunpack.c.l.b16 %v57
  %v174 = vunpack.c.l.b16 %v58
  %v175 = vunpack.c.l.b16 %v59
  %v176 = vunpack.c.l.b16 %v60
  %v177 = vunpack.c.l.b16 %v61
  %v178 = vunpack.c.l.b16 %v62
  %v179 = vunpack.c.l.b16 %v63
  %v180 = vunpack.c.l.b16 %v64
  %v181 = vunpack.c.l.b16 %v65
  %v182 = vpack.c.b16 %v135, %v134
  %v183 = vpack.c.b16 %v137, %v136
  %v184 = vpack.c.b16 %v139, %v138
  %v185 = vpack.c.b16 %v141, %v140
  %v186 = vpack.c.b16 %v143, %v142
  %v187 = vpack.c.b16 %v145, %v144
  %v188 = vpack.c.b16 %v147, %v146
  %v189 = vpack.c.b16 %v149, %v148
  %v190 = vpack.c.b16 %v151, %v150
  %v191 = vpack.c.b16 %v153, %v152
  %v192 = vpack.c.b16 %v155, %v154
  %v193 = vpack.c.b16 %v157, %v156
  %v194 = vpack.c.b16 %v159, %v158
  %v195 = vpack.c.b16 %v161, %v160
  %v196 = vpack.c.b16 %v163, %v162
  %v197 = vpack.c.b16 %v165, %v164
  %v198 = vpack.c.b16 %v167, %v166
  %v199 = vpack.c.b16 %v169, %v168
  %v200 = vpack.c.b16 %v171, %v170
  %v201 = vpack.c.b16 %v173, %v172
  %v202 = vpack.c.b16 %v175, %v174
  %v203 = vpack.c.b16 %v177, %v176
  %v204 = vpack.c.b16 %v179, %v178
  %v205 = vpack.c.b16 %v181, %v180
  %230 = vmatpush.bf16.msra.mxu0 %v189
  %231 = vmatpush.bf16.msra.mxu0 %v188
  %232 = vmatpush.bf16.msra.mxu0 %v187
  %233 = vmatpush.bf16.msra.mxu0 %v186
  %234 = vmatpush.bf16.msra.mxu0 %v185
  %235 = vmatpush.bf16.msra.mxu0 %v184
  %236 = vmatpush.bf16.msra.mxu0 %v183
  %237 = vmatpush.bf16.msra.mxu0 %v182
  %238 = vmatmul.bf16.gmra.mxu0 %v80
  %v239 = vpop.f32.mrf.mxu0
  %v240 = vadd.f32 %v68, %v239
  %v241 = vpop.f32.mrf.mxu0
  %v242 = vadd.f32 %v68, %v241
  %243 = vdwg.mxu0
  %244 = vmatpush.bf16.msra.mxu0 %v197
  %245 = vmatpush.bf16.msra.mxu0 %v196
  %246 = vmatpush.bf16.msra.mxu0 %v195
  %247 = vmatpush.bf16.msra.mxu0 %v194
  %248 = vmatpush.bf16.msra.mxu0 %v193
  %249 = vmatpush.bf16.msra.mxu0 %v192
  %250 = vmatpush.bf16.msra.mxu0 %v191
  %251 = vmatpush.bf16.msra.mxu0 %v190
  %252 = vmatmul.bf16.gmra.mxu0 %v81
  %v253 = vpop.f32.mrf.mxu0
  %v254 = vadd.f32 %v240, %v253
  %v255 = vpop.f32.mrf.mxu0
  %v256 = vadd.f32 %v242, %v255
  %257 = vdwg.mxu0
  %258 = vmatpush.bf16.msra.mxu0 %v205
  %259 = vmatpush.bf16.msra.mxu0 %v204
  %260 = vmatpush.bf16.msra.mxu0 %v203
  %261 = vmatpush.bf16.msra.mxu0 %v202
  %262 = vmatpush.bf16.msra.mxu0 %v201
  %263 = vmatpush.bf16.msra.mxu0 %v200
  %264 = vmatpush.bf16.msra.mxu0 %v199
  %265 = vmatpush.bf16.msra.mxu0 %v198
  %266 = vmatmul.bf16.gmra.mxu0 %v82
  %v267 = vpop.f32.mrf.mxu0
  %v268 = vadd.f32 %v254, %v267
  %v269 = vpop.f32.mrf.mxu0
  %v270 = vadd.f32 %v256, %v269
  %271 = vdwg.mxu0
  %v272 = vpack.c.bf16 %v268, %v268
  %v273 = vpack.c.bf16 %v270, %v270
  %274 = vst [vmem:[%s3] sm:$0xf] %v272
  %275 = vst [vmem:[%s3 + $0x4] sm:$0xf] %v273
  // Predicated region
  $region14: #{neural_language_model_forward.3} parent=0 // pred_check
    _
  $region15: #{neural_language_model_forward.3} parent=0 // pred_check_branch
    %277 = sbr.rel (0) target = $region17
  $region16: #{neural_language_model_forward.3} parent=0 // pred_region
    _
  $region17: #{neural_language_model_forward.3} parent=0 // pred_fallthru
    _
  // Predicated region
  $region18: #{neural_language_model_forward.3} parent=0 // pred_check
    _
  $region19: #{neural_language_model_forward.3} parent=0 // pred_check_branch
    %279 = sbr.rel (0) target = $region21
  $region20: #{neural_language_model_forward.3} parent=0 // pred_region
    _
  $region21: #{neural_language_model_forward.3} parent=0 // pred_fallthru
    _

// kernel: neural_language_model_forward.2
$region0: #{neural_language_model_forward.2}
  #allocation0 [shape = 'u32[]', space=smem, size = 0x4, offset = 0x4, fixed_abs, tag = 'smem constant byte address 0x4 - core index']
  #allocation1 [shape = 'u32[72,128]{1,0:T(1,128)}', space=vmem, size = 0x9000, scoped, tag = 'internal scratch']
  %s0 = inlined_call_operand.vmem [shape: bf16[16,1536], index: 0, kind: input, shape index: {}]
  %s1 = inlined_call_operand.hbm [shape: bf16[1536,384], index: 1, kind: input, shape index: {}]
  %s2 = inlined_call_operand.hbm [shape: f32[1,384], index: 2, kind: input, shape index: {}]
  %s3 = inlined_call_operand.vmem [shape: bf16[16,384], index: 3, kind: output, shape index: {}]
  %s4 = sld [smem:[#allocation0]]
  $region30: #{neural_language_model_forward.2} parent=0
    _
  %s6 = ssub.s32 1, %s4
  %s7 = scalar_select 0, %s6, %s4
  $region1: #{neural_language_model_forward.2} parent=0
    #allocation2 [shape = 'u8[1179648]{0}', space=vmem, size = 0x120000, scoped, tag = 'input window, operand 1, single buffered']
    #allocation3 [shape = 's32[1]{0}', space=sflag, size = 0x4, scoped, tag = 'scoped memory for neural_language_model_forward.2']
    #allocation4 [shape = 'u8[1536]{0}', space=vmem, size = 0x800, scoped, tag = 'input window, operand 2, single buffered']
    #allocation5 [shape = 's32[1]{0}', space=sflag, size = 0x4, scoped, tag = 'scoped memory for neural_language_model_forward.2']
    %8 = vsyncpa [#allocation3], 0
    %9 = vsyncpa [#allocation5], 0
    // Predicated region
    $region2: #{neural_language_model_forward.2} parent=1 // pred_check
      _
    $region3: #{neural_language_model_forward.2} parent=1 // pred_check_branch
      %11 = sbr.rel (0) target = $region5
    $region4: #{neural_language_model_forward.2} parent=1 // pred_region
      _
    $region5: #{neural_language_model_forward.2} parent=1 // pred_fallthru
      _
    // Predicated region
    $region6: #{neural_language_model_forward.2} parent=1 // pred_check
      _
    $region7: #{neural_language_model_forward.2} parent=1 // pred_check_branch
      %13 = sbr.rel (0) target = $region9
    $region8: #{neural_language_model_forward.2} parent=1 // pred_region
      %15 = vsyncadd [#allocation3], 0
      %s16 = sshll.u32 %s1, 4
      %s17 = int_to_ptr.hbm [resolvable:$true] %s16
      %s18 = sshll.u32 [#allocation2], 4
      %s19 = int_to_ptr.vmem [resolvable:$true] %s18
      %24 = dma.hbm_to_vmem [thread:$0]  %s17, 36864, %s19, [#allocation3], 192, 192, 12
    $region9: #{neural_language_model_forward.2} parent=1 // pred_fallthru
      _
    // Predicated region
    $region10: #{neural_language_model_forward.2} parent=1 // pred_check
      _
    $region11: #{neural_language_model_forward.2} parent=1 // pred_check_branch
      %26 = sbr.rel (0) target = $region13
    $region12: #{neural_language_model_forward.2} parent=1 // pred_region
      %28 = vsyncadd [#allocation5], 0
      %s30 = sshll.u32 %s2, 4
      %s31 = int_to_ptr.hbm [resolvable:$true] %s30
      %s32 = sshll.u32 [#allocation4], 4
      %s33 = int_to_ptr.vmem [resolvable:$true] %s32
      %35 = dma.hbm_to_vmem [thread:$0]  %s31, 48, %s33, [#allocation5]
    $region13: #{neural_language_model_forward.2} parent=1 // pred_fallthru
      _
    // Predicated region
    $region14: #{neural_language_model_forward.2} parent=1 // pred_check
      _
    $region15: #{neural_language_model_forward.2} parent=1 // pred_check_branch
      %37 = sbr.rel (0) target = $region17
    $region16: #{neural_language_model_forward.2} parent=1 // pred_region
      %39 = dma.done [#allocation3], 36864
    $region17: #{neural_language_model_forward.2} parent=1 // pred_fallthru
      _
    // Predicated region
    $region18: #{neural_language_model_forward.2} parent=1 // pred_check
      _
    $region19: #{neural_language_model_forward.2} parent=1 // pred_check_branch
      %41 = sbr.rel (0) target = $region21
    $region20: #{neural_language_model_forward.2} parent=1 // pred_region
      %43 = dma.done [#allocation5], 48
    $region21: #{neural_language_model_forward.2} parent=1 // pred_fallthru
      _
    %v44 = vld [vmem:[%s0] sm:$0xff]
    %v45 = vld [vmem:[%s0 + $0x8] sm:$0xff]
    %v46 = vld [vmem:[%s0 + $0x10] sm:$0xff]
    %v47 = vld [vmem:[%s0 + $0x18] sm:$0xff]
    %v48 = vld [vmem:[%s0 + $0x20] sm:$0xff]
    %v49 = vld [vmem:[%s0 + $0x28] sm:$0xff]
    %v50 = vld [vmem:[%s0 + $0x30] sm:$0xff]
    %v51 = vld [vmem:[%s0 + $0x38] sm:$0xff]
    %v52 = vld [vmem:[%s0 + $0x40] sm:$0xff]
    %v53 = vld [vmem:[%s0 + $0x48] sm:$0xff]
    %v54 = vld [vmem:[%s0 + $0x50] sm:$0xff]
    %v55 = vld [vmem:[%s0 + $0x58] sm:$0xff]
    %v56 = vld [vmem:[#allocation2] sm:$0xff]
    %v57 = vld [vmem:[#allocation2 + $0x8] sm:$0xf]
    %v58 = vld [vmem:[#allocation2 + $0xc] sm:$0xff]
    %v59 = vld [vmem:[#allocation2 + $0x14] sm:$0xf]
    %v60 = vld [vmem:[#allocation2 + $0x18] sm:$0xff]
    %v61 = vld [vmem:[#allocation2 + $0x20] sm:$0xf]
    %v62 = vld [vmem:[#allocation2 + $0x24] sm:$0xff]
    %v63 = vld [vmem:[#allocation2 + $0x2c] sm:$0xf]
    %v64 = vld [vmem:[#allocation2 + $0x30] sm:$0xff]
    %v65 = vld [vmem:[#allocation2 + $0x38] sm:$0xf]
    %v66 = vld [vmem:[#allocation2 + $0x3c] sm:$0xff]
    %v67 = vld [vmem:[#allocation2 + $0x44] sm:$0xf]
    %v68 = vld [vmem:[#allocation2 + $0x48] sm:$0xff]
    %v69 = vld [vmem:[#allocation2 + $0x50] sm:$0xf]
    %v70 = vld [vmem:[#allocation2 + $0x54] sm:$0xff]
    %v71 = vld [vmem:[#allocation2 + $0x5c] sm:$0xf]
    %v72 = vld [vmem:[#allocation2 + $0x60] sm:$0xff]
    %v73 = vld [vmem:[#allocation2 + $0x68] sm:$0xf]
    %v74 = vld [vmem:[#allocation2 + $0x6c] sm:$0xff]
    %v75 = vld [vmem:[#allocation2 + $0x74] sm:$0xf]
    %v76 = vld [vmem:[#allocation2 + $0x78] sm:$0xff]
    %v77 = vld [vmem:[#allocation2 + $0x80] sm:$0xf]
    %v78 = vld [vmem:[#allocation2 + $0x84] sm:$0xff]
    %v79 = vld [vmem:[#allocation2 + $0x8c] sm:$0xf]
    %v80 = vld [vmem:[#allocation2 + $0x90] sm:$0xff]
    %v81 = vld [vmem:[#allocation2 + $0x98] sm:$0xf]
    %v82 = vld [vmem:[#allocation2 + $0x9c] sm:$0xff]
    %v83 = vld [vmem:[#allocation2 + $0xa4] sm:$0xf]
    %v84 = vld [vmem:[#allocation2 + $0xa8] sm:$0xff]
    %v85 = vld [vmem:[#allocation2 + $0xb0] sm:$0xf]
    %v86 = vld [vmem:[#allocation2 + $0xb4] sm:$0xff]
    %v87 = vld [vmem:[#allocation2 + $0xbc] sm:$0xf]
    %v88 = vld [vmem:[#allocation2 + $0xc0] sm:$0xff]
    %v89 = vld [vmem:[#allocation2 + $0xc8] sm:$0xf]
    %v90 = vld [vmem:[#allocation2 + $0xcc] sm:$0xff]
    %v91 = vld [vmem:[#allocation2 + $0xd4] sm:$0xf]
    %v92 = vld [vmem:[#allocation2 + $0xd8] sm:$0xff]
    %v93 = vld [vmem:[#allocation2 + $0xe0] sm:$0xf]
    %v94 = vld [vmem:[#allocation2 + $0xe4] sm:$0xff]
    %v95 = vld [vmem:[#allocation2 + $0xec] sm:$0xf]
    %v96 = vld [vmem:[#allocation2 + $0xf0] sm:$0xff]
    %v97 = vld [vmem:[#allocation2 + $0xf8] sm:$0xf]
    %v98 = vld [vmem:[#allocation2 + $0xfc] sm:$0xff]
    %v99 = vld [vmem:[#allocation2 + $0x104] sm:$0xf]
    %v100 = vld [vmem:[#allocation2 + $0x108] sm:$0xff]
    %v101 = vld [vmem:[#allocation2 + $0x110] sm:$0xf]
    %v102 = vld [vmem:[#allocation2 + $0x114] sm:$0xff]
    %v103 = vld [vmem:[#allocation2 + $0x11c] sm:$0xf]
    %v104 = vld [vmem:[#allocation2 + $0x120] sm:$0xff]
    %v105 = vld [vmem:[#allocation2 + $0x128] sm:$0xf]
    %v106 = vld [vmem:[#allocation2 + $0x12c] sm:$0xff]
    %v107 = vld [vmem:[#allocation2 + $0x134] sm:$0xf]
    %v108 = vld [vmem:[#allocation2 + $0x138] sm:$0xff]
    %v109 = vld [vmem:[#allocation2 + $0x140] sm:$0xf]
    %v110 = vld [vmem:[#allocation2 + $0x144] sm:$0xff]
    %v111 = vld [vmem:[#allocation2 + $0x14c] sm:$0xf]
    %v112 = vld [vmem:[#allocation2 + $0x150] sm:$0xff]
    %v113 = vld [vmem:[#allocation2 + $0x158] sm:$0xf]
    %v114 = vld [vmem:[#allocation2 + $0x15c] sm:$0xff]
    %v115 = vld [vmem:[#allocation2 + $0x164] sm:$0xf]
    %v116 = vld [vmem:[#allocation2 + $0x168] sm:$0xff]
    %v117 = vld [vmem:[#allocation2 + $0x170] sm:$0xf]
    %v118 = vld [vmem:[#allocation2 + $0x174] sm:$0xff]
    %v119 = vld [vmem:[#allocation2 + $0x17c] sm:$0xf]
    %v120 = vld [vmem:[#allocation2 + $0x180] sm:$0xff]
    %v121 = vld [vmem:[#allocation2 + $0x188] sm:$0xf]
    %v122 = vld [vmem:[#allocation2 + $0x18c] sm:$0xff]
    %v123 = vld [vmem:[#allocation2 + $0x194] sm:$0xf]
    %v124 = vld [vmem:[#allocation2 + $0x198] sm:$0xff]
    %v125 = vld [vmem:[#allocation2 + $0x1a0] sm:$0xf]
    %v126 = vld [vmem:[#allocation2 + $0x1a4] sm:$0xff]
    %v127 = vld [vmem:[#allocation2 + $0x1ac] sm:$0xf]
    %v128 = vld [vmem:[#allocation2 + $0x1b0] sm:$0xff]
    %v129 = vld [vmem:[#allocation2 + $0x1b8] sm:$0xf]
    %v130 = vld [vmem:[#allocation2 + $0x1bc] sm:$0xff]
    %v131 = vld [vmem:[#allocation2 + $0x1c4] sm:$0xf]
    %v132 = vld [vmem:[#allocation2 + $0x1c8] sm:$0xff]
    %v133 = vld [vmem:[#allocation2 + $0x1d0] sm:$0xf]
    %v134 = vld [vmem:[#allocation2 + $0x1d4] sm:$0xff]
    %v135 = vld [vmem:[#allocation2 + $0x1dc] sm:$0xf]
    %v136 = vld [vmem:[#allocation2 + $0x1e0] sm:$0xff]
    %v137 = vld [vmem:[#allocation2 + $0x1e8] sm:$0xf]
    %v138 = vld [vmem:[#allocation2 + $0x1ec] sm:$0xff]
    %v139 = vld [vmem:[#allocation2 + $0x1f4] sm:$0xf]
    %v140 = vld [vmem:[#allocation2 + $0x1f8] sm:$0xff]
    %v141 = vld [vmem:[#allocation2 + $0x200] sm:$0xf]
    %v142 = vld [vmem:[#allocation2 + $0x204] sm:$0xff]
    %v143 = vld [vmem:[#allocation2 + $0x20c] sm:$0xf]
    %v144 = vld [vmem:[#allocation2 + $0x210] sm:$0xff]
    %v145 = vld [vmem:[#allocation2 + $0x218] sm:$0xf]
    %v146 = vld [vmem:[#allocation2 + $0x21c] sm:$0xff]
    %v147 = vld [vmem:[#allocation2 + $0x224] sm:$0xf]
    %v148 = vld [vmem:[#allocation2 + $0x228] sm:$0xff]
    %v149 = vld [vmem:[#allocation2 + $0x230] sm:$0xf]
    %v150 = vld [vmem:[#allocation2 + $0x234] sm:$0xff]
    %v151 = vld [vmem:[#allocation2 + $0x23c] sm:$0xf]
    %v152 = vld [vmem:[#allocation2 + $0x240] sm:$0xff]
    %v153 = vld [vmem:[#allocation2 + $0x248] sm:$0xf]
    %v154 = vld [vmem:[#allocation2 + $0x24c] sm:$0xff]
    %v155 = vld [vmem:[#allocation2 + $0x254] sm:$0xf]
    %v156 = vld [vmem:[#allocation2 + $0x258] sm:$0xff]
    %v157 = vld [vmem:[#allocation2 + $0x260] sm:$0xf]
    %v158 = vld [vmem:[#allocation2 + $0x264] sm:$0xff]
    %v159 = vld [vmem:[#allocation2 + $0x26c] sm:$0xf]
    %v160 = vld [vmem:[#allocation2 + $0x270] sm:$0xff]
    %v161 = vld [vmem:[#allocation2 + $0x278] sm:$0xf]
    %v162 = vld [vmem:[#allocation2 + $0x27c] sm:$0xff]
    %v163 = vld [vmem:[#allocation2 + $0x284] sm:$0xf]
    %v164 = vld [vmem:[#allocation2 + $0x288] sm:$0xff]
    %v165 = vld [vmem:[#allocation2 + $0x290] sm:$0xf]
    %v166 = vld [vmem:[#allocation2 + $0x294] sm:$0xff]
    %v167 = vld [vmem:[#allocation2 + $0x29c] sm:$0xf]
    %v168 = vld [vmem:[#allocation2 + $0x2a0] sm:$0xff]
    %v169 = vld [vmem:[#allocation2 + $0x2a8] sm:$0xf]
    %v170 = vld [vmem:[#allocation2 + $0x2ac] sm:$0xff]
    %v171 = vld [vmem:[#allocation2 + $0x2b4] sm:$0xf]
    %v172 = vld [vmem:[#allocation2 + $0x2b8] sm:$0xff]
    %v173 = vld [vmem:[#allocation2 + $0x2c0] sm:$0xf]
    %v174 = vld [vmem:[#allocation2 + $0x2c4] sm:$0xff]
    %v175 = vld [vmem:[#allocation2 + $0x2cc] sm:$0xf]
    %v176 = vld [vmem:[#allocation2 + $0x2d0] sm:$0xff]
    %v177 = vld [vmem:[#allocation2 + $0x2d8] sm:$0xf]
    %v178 = vld [vmem:[#allocation2 + $0x2dc] sm:$0xff]
    %v179 = vld [vmem:[#allocation2 + $0x2e4] sm:$0xf]
    %v180 = vld [vmem:[#allocation2 + $0x2e8] sm:$0xff]
    %v181 = vld [vmem:[#allocation2 + $0x2f0] sm:$0xf]
    %v182 = vld [vmem:[#allocation2 + $0x2f4] sm:$0xff]
    %v183 = vld [vmem:[#allocation2 + $0x2fc] sm:$0xf]
    %v184 = vld [vmem:[#allocation2 + $0x300] sm:$0xff]
    %v185 = vld [vmem:[#allocation2 + $0x308] sm:$0xf]
    %v186 = vld [vmem:[#allocation2 + $0x30c] sm:$0xff]
    %v187 = vld [vmem:[#allocation2 + $0x314] sm:$0xf]
    %v188 = vld [vmem:[#allocation2 + $0x318] sm:$0xff]
    %v189 = vld [vmem:[#allocation2 + $0x320] sm:$0xf]
    %v190 = vld [vmem:[#allocation2 + $0x324] sm:$0xff]
    %v191 = vld [vmem:[#allocation2 + $0x32c] sm:$0xf]
    %v192 = vld [vmem:[#allocation2 + $0x330] sm:$0xff]
    %v193 = vld [vmem:[#allocation2 + $0x338] sm:$0xf]
    %v194 = vld [vmem:[#allocation2 + $0x33c] sm:$0xff]
    %v195 = vld [vmem:[#allocation2 + $0x344] sm:$0xf]
    %v196 = vld [vmem:[#allocation2 + $0x348] sm:$0xff]
    %v197 = vld [vmem:[#allocation2 + $0x350] sm:$0xf]
    %v198 = vld [vmem:[#allocation2 + $0x354] sm:$0xff]
    %v199 = vld [vmem:[#allocation2 + $0x35c] sm:$0xf]
    %v200 = vld [vmem:[#allocation2 + $0x360] sm:$0xff]
    %v201 = vld [vmem:[#allocation2 + $0x368] sm:$0xf]
    %v202 = vld [vmem:[#allocation2 + $0x36c] sm:$0xff]
    %v203 = vld [vmem:[#allocation2 + $0x374] sm:$0xf]
    %v204 = vld [vmem:[#allocation2 + $0x378] sm:$0xff]
    %v205 = vld [vmem:[#allocation2 + $0x380] sm:$0xf]
    %v206 = vld [vmem:[#allocation2 + $0x384] sm:$0xff]
    %v207 = vld [vmem:[#allocation2 + $0x38c] sm:$0xf]
    %v208 = vld [vmem:[#allocation2 + $0x390] sm:$0xff]
    %v209 = vld [vmem:[#allocation2 + $0x398] sm:$0xf]
    %v210 = vld [vmem:[#allocation2 + $0x39c] sm:$0xff]
    %v211 = vld [vmem:[#allocation2 + $0x3a4] sm:$0xf]
    %v212 = vld [vmem:[#allocation2 + $0x3a8] sm:$0xff]
    %v213 = vld [vmem:[#allocation2 + $0x3b0] sm:$0xf]
    %v214 = vld [vmem:[#allocation2 + $0x3b4] sm:$0xff]
    %v215 = vld [vmem:[#allocation2 + $0x3bc] sm:$0xf]
    %v216 = vld [vmem:[#allocation2 + $0x3c0] sm:$0xff]
    %v217 = vld [vmem:[#allocation2 + $0x3c8] sm:$0xf]
    %v218 = vld [vmem:[#allocation2 + $0x3cc] sm:$0xff]
    %v219 = vld [vmem:[#allocation2 + $0x3d4] sm:$0xf]
    %v220 = vld [vmem:[#allocation2 + $0x3d8] sm:$0xff]
    %v221 = vld [vmem:[#allocation2 + $0x3e0] sm:$0xf]
    %v222 = vld [vmem:[#allocation2 + $0x3e4] sm:$0xff]
    %v223 = vld [vmem:[#allocation2 + $0x3ec] sm:$0xf]
    %v224 = vld [vmem:[#allocation2 + $0x3f0] sm:$0xff]
    %v225 = vld [vmem:[#allocation2 + $0x3f8] sm:$0xf]
    %v226 = vld [vmem:[#allocation2 + $0x3fc] sm:$0xff]
    %v227 = vld [vmem:[#allocation2 + $0x404] sm:$0xf]
    %v228 = vld [vmem:[#allocation2 + $0x408] sm:$0xff]
    %v229 = vld [vmem:[#allocation2 + $0x410] sm:$0xf]
    %v230 = vld [vmem:[#allocation2 + $0x414] sm:$0xff]
    %v231 = vld [vmem:[#allocation2 + $0x41c] sm:$0xf]
    %v232 = vld [vmem:[#allocation2 + $0x420] sm:$0xff]
    %v233 = vld [vmem:[#allocation2 + $0x428] sm:$0xf]
    %v234 = vld [vmem:[#allocation2 + $0x42c] sm:$0xff]
    %v235 = vld [vmem:[#allocation2 + $0x434] sm:$0xf]
    %v236 = vld [vmem:[#allocation2 + $0x438] sm:$0xff]
    %v237 = vld [vmem:[#allocation2 + $0x440] sm:$0xf]
    %v238 = vld [vmem:[#allocation2 + $0x444] sm:$0xff]
    %v239 = vld [vmem:[#allocation2 + $0x44c] sm:$0xf]
    %v240 = vld [vmem:[#allocation2 + $0x450] sm:$0xff]
    %v241 = vld [vmem:[#allocation2 + $0x458] sm:$0xf]
    %v242 = vld [vmem:[#allocation2 + $0x45c] sm:$0xff]
    %v243 = vld [vmem:[#allocation2 + $0x464] sm:$0xf]
    %v244 = vld [vmem:[#allocation2 + $0x468] sm:$0xff]
    %v245 = vld [vmem:[#allocation2 + $0x470] sm:$0xf]
    %v246 = vld [vmem:[#allocation2 + $0x474] sm:$0xff]
    %v247 = vld [vmem:[#allocation2 + $0x47c] sm:$0xf]
    %v248 = vld [vmem:[#allocation2 + $0x480] sm:$0xff]
    %v249 = vld [vmem:[#allocation2 + $0x488] sm:$0xf]
    %v250 = vld [vmem:[#allocation2 + $0x48c] sm:$0xff]
    %v251 = vld [vmem:[#allocation2 + $0x494] sm:$0xf]
    %v252 = vld [vmem:[#allocation2 + $0x498] sm:$0xff]
    %v253 = vld [vmem:[#allocation2 + $0x4a0] sm:$0xf]
    %v254 = vld [vmem:[#allocation2 + $0x4a4] sm:$0xff]
    %v255 = vld [vmem:[#allocation2 + $0x4ac] sm:$0xf]
    %v256 = vld [vmem:[#allocation2 + $0x4b0] sm:$0xff]
    %v257 = vld [vmem:[#allocation2 + $0x4b8] sm:$0xf]
    %v258 = vld [vmem:[#allocation2 + $0x4bc] sm:$0xff]
    %v259 = vld [vmem:[#allocation2 + $0x4c4] sm:$0xf]
    %v260 = vld [vmem:[#allocation2 + $0x4c8] sm:$0xff]
    %v261 = vld [vmem:[#allocation2 + $0x4d0] sm:$0xf]
    %v262 = vld [vmem:[#allocation2 + $0x4d4] sm:$0xff]
    %v263 = vld [vmem:[#allocation2 + $0x4dc] sm:$0xf]
    %v264 = vld [vmem:[#allocation2 + $0x4e0] sm:$0xff]
    %v265 = vld [vmem:[#allocation2 + $0x4e8] sm:$0xf]
    %v266 = vld [vmem:[#allocation2 + $0x4ec] sm:$0xff]
    %v267 = vld [vmem:[#allocation2 + $0x4f4] sm:$0xf]
    %v268 = vld [vmem:[#allocation2 + $0x4f8] sm:$0xff]
    %v269 = vld [vmem:[#allocation2 + $0x500] sm:$0xf]
    %v270 = vld [vmem:[#allocation2 + $0x504] sm:$0xff]
    %v271 = vld [vmem:[#allocation2 + $0x50c] sm:$0xf]
    %v272 = vld [vmem:[#allocation2 + $0x510] sm:$0xff]
    %v273 = vld [vmem:[#allocation2 + $0x518] sm:$0xf]
    %v274 = vld [vmem:[#allocation2 + $0x51c] sm:$0xff]
    %v275 = vld [vmem:[#allocation2 + $0x524] sm:$0xf]
    %v276 = vld [vmem:[#allocation2 + $0x528] sm:$0xff]
    %v277 = vld [vmem:[#allocation2 + $0x530] sm:$0xf]
    %v278 = vld [vmem:[#allocation2 + $0x534] sm:$0xff]
    %v279 = vld [vmem:[#allocation2 + $0x53c] sm:$0xf]
    %v280 = vld [vmem:[#allocation2 + $0x540] sm:$0xff]
    %v281 = vld [vmem:[#allocation2 + $0x548] sm:$0xf]
    %v282 = vld [vmem:[#allocation2 + $0x54c] sm:$0xff]
    %v283 = vld [vmem:[#allocation2 + $0x554] sm:$0xf]
    %v284 = vld [vmem:[#allocation2 + $0x558] sm:$0xff]
    %v285 = vld [vmem:[#allocation2 + $0x560] sm:$0xf]
    %v286 = vld [vmem:[#allocation2 + $0x564] sm:$0xff]
    %v287 = vld [vmem:[#allocation2 + $0x56c] sm:$0xf]
    %v288 = vld [vmem:[#allocation2 + $0x570] sm:$0xff]
    %v289 = vld [vmem:[#allocation2 + $0x578] sm:$0xf]
    %v290 = vld [vmem:[#allocation2 + $0x57c] sm:$0xff]
    %v291 = vld [vmem:[#allocation2 + $0x584] sm:$0xf]
    %v292 = vld [vmem:[#allocation2 + $0x588] sm:$0xff]
    %v293 = vld [vmem:[#allocation2 + $0x590] sm:$0xf]
    %v294 = vld [vmem:[#allocation2 + $0x594] sm:$0xff]
    %v295 = vld [vmem:[#allocation2 + $0x59c] sm:$0xf]
    %v296 = vld [vmem:[#allocation2 + $0x5a0] sm:$0xff]
    %v297 = vld [vmem:[#allocation2 + $0x5a8] sm:$0xf]
    %v298 = vld [vmem:[#allocation2 + $0x5ac] sm:$0xff]
    %v299 = vld [vmem:[#allocation2 + $0x5b4] sm:$0xf]
    %v300 = vld [vmem:[#allocation2 + $0x5b8] sm:$0xff]
    %v301 = vld [vmem:[#allocation2 + $0x5c0] sm:$0xf]
    %v302 = vld [vmem:[#allocation2 + $0x5c4] sm:$0xff]
    %v303 = vld [vmem:[#allocation2 + $0x5cc] sm:$0xf]
    %v304 = vld [vmem:[#allocation2 + $0x5d0] sm:$0xff]
    %v305 = vld [vmem:[#allocation2 + $0x5d8] sm:$0xf]
    %v306 = vld [vmem:[#allocation2 + $0x5dc] sm:$0xff]
    %v307 = vld [vmem:[#allocation2 + $0x5e4] sm:$0xf]
    %v308 = vld [vmem:[#allocation2 + $0x5e8] sm:$0xff]
    %v309 = vld [vmem:[#allocation2 + $0x5f0] sm:$0xf]
    %v310 = vld [vmem:[#allocation2 + $0x5f4] sm:$0xff]
    %v311 = vld [vmem:[#allocation2 + $0x5fc] sm:$0xf]
    %v312 = vld [vmem:[#allocation2 + $0x600] sm:$0xff]
    %v313 = vld [vmem:[#allocation2 + $0x608] sm:$0xf]
    %v314 = vld [vmem:[#allocation2 + $0x60c] sm:$0xff]
    %v315 = vld [vmem:[#allocation2 + $0x614] sm:$0xf]
    %v316 = vld [vmem:[#allocation2 + $0x618] sm:$0xff]
    %v317 = vld [vmem:[#allocation2 + $0x620] sm:$0xf]
    %v318 = vld [vmem:[#allocation2 + $0x624] sm:$0xff]
    %v319 = vld [vmem:[#allocation2 + $0x62c] sm:$0xf]
    %v320 = vld [vmem:[#allocation2 + $0x630] sm:$0xff]
    %v321 = vld [vmem:[#allocation2 + $0x638] sm:$0xf]
    %v322 = vld [vmem:[#allocation2 + $0x63c] sm:$0xff]
    %v323 = vld [vmem:[#allocation2 + $0x644] sm:$0xf]
    %v324 = vld [vmem:[#allocation2 + $0x648] sm:$0xff]
    %v325 = vld [vmem:[#allocation2 + $0x650] sm:$0xf]
    %v326 = vld [vmem:[#allocation2 + $0x654] sm:$0xff]
    %v327 = vld [vmem:[#allocation2 + $0x65c] sm:$0xf]
    %v328 = vld [vmem:[#allocation2 + $0x660] sm:$0xff]
    %v329 = vld [vmem:[#allocation2 + $0x668] sm:$0xf]
    %v330 = vld [vmem:[#allocation2 + $0x66c] sm:$0xff]
    %v331 = vld [vmem:[#allocation2 + $0x674] sm:$0xf]
    %v332 = vld [vmem:[#allocation2 + $0x678] sm:$0xff]
    %v333 = vld [vmem:[#allocation2 + $0x680] sm:$0xf]
    %v334 = vld [vmem:[#allocation2 + $0x684] sm:$0xff]
    %v335 = vld [vmem:[#allocation2 + $0x68c] sm:$0xf]
    %v336 = vld [vmem:[#allocation2 + $0x690] sm:$0xff]
    %v337 = vld [vmem:[#allocation2 + $0x698] sm:$0xf]
    %v338 = vld [vmem:[#allocation2 + $0x69c] sm:$0xff]
    %v339 = vld [vmem:[#allocation2 + $0x6a4] sm:$0xf]
    %v340 = vld [vmem:[#allocation2 + $0x6a8] sm:$0xff]
    %v341 = vld [vmem:[#allocation2 + $0x6b0] sm:$0xf]
    %v342 = vld [vmem:[#allocation2 + $0x6b4] sm:$0xff]
    %v343 = vld [vmem:[#allocation2 + $0x6bc] sm:$0xf]
    %v344 = vld [vmem:[#allocation2 + $0x6c0] sm:$0xff]
    %v345 = vld [vmem:[#allocation2 + $0x6c8] sm:$0xf]
    %v346 = vld [vmem:[#allocation2 + $0x6cc] sm:$0xff]
    %v347 = vld [vmem:[#allocation2 + $0x6d4] sm:$0xf]
    %v348 = vld [vmem:[#allocation2 + $0x6d8] sm:$0xff]
    %v349 = vld [vmem:[#allocation2 + $0x6e0] sm:$0xf]
    %v350 = vld [vmem:[#allocation2 + $0x6e4] sm:$0xff]
    %v351 = vld [vmem:[#allocation2 + $0x6ec] sm:$0xf]
    %v352 = vld [vmem:[#allocation2 + $0x6f0] sm:$0xff]
    %v353 = vld [vmem:[#allocation2 + $0x6f8] sm:$0xf]
    %v354 = vld [vmem:[#allocation2 + $0x6fc] sm:$0xff]
    %v355 = vld [vmem:[#allocation2 + $0x704] sm:$0xf]
    %v356 = vld [vmem:[#allocation2 + $0x708] sm:$0xff]
    %v357 = vld [vmem:[#allocation2 + $0x710] sm:$0xf]
    %v358 = vld [vmem:[#allocation2 + $0x714] sm:$0xff]
    %v359 = vld [vmem:[#allocation2 + $0x71c] sm:$0xf]
    %v360 = vld [vmem:[#allocation2 + $0x720] sm:$0xff]
    %v361 = vld [vmem:[#allocation2 + $0x728] sm:$0xf]
    %v362 = vld [vmem:[#allocation2 + $0x72c] sm:$0xff]
    %v363 = vld [vmem:[#allocation2 + $0x734] sm:$0xf]
    %v364 = vld [vmem:[#allocation2 + $0x738] sm:$0xff]
    %v365 = vld [vmem:[#allocation2 + $0x740] sm:$0xf]
    %v366 = vld [vmem:[#allocation2 + $0x744] sm:$0xff]
    %v367 = vld [vmem:[#allocation2 + $0x74c] sm:$0xf]
    %v368 = vld [vmem:[#allocation2 + $0x750] sm:$0xff]
    %v369 = vld [vmem:[#allocation2 + $0x758] sm:$0xf]
    %v370 = vld [vmem:[#allocation2 + $0x75c] sm:$0xff]
    %v371 = vld [vmem:[#allocation2 + $0x764] sm:$0xf]
    %v372 = vld [vmem:[#allocation2 + $0x768] sm:$0xff]
    %v373 = vld [vmem:[#allocation2 + $0x770] sm:$0xf]
    %v374 = vld [vmem:[#allocation2 + $0x774] sm:$0xff]
    %v375 = vld [vmem:[#allocation2 + $0x77c] sm:$0xf]
    %v376 = vld [vmem:[#allocation2 + $0x780] sm:$0xff]
    %v377 = vld [vmem:[#allocation2 + $0x788] sm:$0xf]
    %v378 = vld [vmem:[#allocation2 + $0x78c] sm:$0xff]
    %v379 = vld [vmem:[#allocation2 + $0x794] sm:$0xf]
    %v380 = vld [vmem:[#allocation2 + $0x798] sm:$0xff]
    %v381 = vld [vmem:[#allocation2 + $0x7a0] sm:$0xf]
    %v382 = vld [vmem:[#allocation2 + $0x7a4] sm:$0xff]
    %v383 = vld [vmem:[#allocation2 + $0x7ac] sm:$0xf]
    %v384 = vld [vmem:[#allocation2 + $0x7b0] sm:$0xff]
    %v385 = vld [vmem:[#allocation2 + $0x7b8] sm:$0xf]
    %v386 = vld [vmem:[#allocation2 + $0x7bc] sm:$0xff]
    %v387 = vld [vmem:[#allocation2 + $0x7c4] sm:$0xf]
    %v388 = vld [vmem:[#allocation2 + $0x7c8] sm:$0xff]
    %v389 = vld [vmem:[#allocation2 + $0x7d0] sm:$0xf]
    %v390 = vld [vmem:[#allocation2 + $0x7d4] sm:$0xff]
    %v391 = vld [vmem:[#allocation2 + $0x7dc] sm:$0xf]
    %v392 = vld [vmem:[#allocation2 + $0x7e0] sm:$0xff]
    %v393 = vld [vmem:[#allocation2 + $0x7e8] sm:$0xf]
    %v394 = vld [vmem:[#allocation2 + $0x7ec] sm:$0xff]
    %v395 = vld [vmem:[#allocation2 + $0x7f4] sm:$0xf]
    %v396 = vld [vmem:[#allocation2 + $0x7f8] sm:$0xff]
    %v397 = vld [vmem:[#allocation2 + $0x800] sm:$0xf]
    %v398 = vld [vmem:[#allocation2 + $0x804] sm:$0xff]
    %v399 = vld [vmem:[#allocation2 + $0x80c] sm:$0xf]
    %v400 = vld [vmem:[#allocation2 + $0x810] sm:$0xff]
    %v401 = vld [vmem:[#allocation2 + $0x818] sm:$0xf]
    %v402 = vld [vmem:[#allocation2 + $0x81c] sm:$0xff]
    %v403 = vld [vmem:[#allocation2 + $0x824] sm:$0xf]
    %v404 = vld [vmem:[#allocation2 + $0x828] sm:$0xff]
    %v405 = vld [vmem:[#allocation2 + $0x830] sm:$0xf]
    %v406 = vld [vmem:[#allocation2 + $0x834] sm:$0xff]
    %v407 = vld [vmem:[#allocation2 + $0x83c] sm:$0xf]
    %v408 = vld [vmem:[#allocation2 + $0x840] sm:$0xff]
    %v409 = vld [vmem:[#allocation2 + $0x848] sm:$0xf]
    %v410 = vld [vmem:[#allocation2 + $0x84c] sm:$0xff]
    %v411 = vld [vmem:[#allocation2 + $0x854] sm:$0xf]
    %v412 = vld [vmem:[#allocation2 + $0x858] sm:$0xff]
    %v413 = vld [vmem:[#allocation2 + $0x860] sm:$0xf]
    %v414 = vld [vmem:[#allocation2 + $0x864] sm:$0xff]
    %v415 = vld [vmem:[#allocation2 + $0x86c] sm:$0xf]
    %v416 = vld [vmem:[#allocation2 + $0x870] sm:$0xff]
    %v417 = vld [vmem:[#allocation2 + $0x878] sm:$0xf]
    %v418 = vld [vmem:[#allocation2 + $0x87c] sm:$0xff]
    %v419 = vld [vmem:[#allocation2 + $0x884] sm:$0xf]
    %v420 = vld [vmem:[#allocation2 + $0x888] sm:$0xff]
    %v421 = vld [vmem:[#allocation2 + $0x890] sm:$0xf]
    %v422 = vld [vmem:[#allocation2 + $0x894] sm:$0xff]
    %v423 = vld [vmem:[#allocation2 + $0x89c] sm:$0xf]
    %v424 = vld [vmem:[#allocation2 + $0x8a0] sm:$0xff]
    %v425 = vld [vmem:[#allocation2 + $0x8a8] sm:$0xf]
    %v426 = vld [vmem:[#allocation2 + $0x8ac] sm:$0xff]
    %v427 = vld [vmem:[#allocation2 + $0x8b4] sm:$0xf]
    %v428 = vld [vmem:[#allocation2 + $0x8b8] sm:$0xff]
    %v429 = vld [vmem:[#allocation2 + $0x8c0] sm:$0xf]
    %v430 = vld [vmem:[#allocation2 + $0x8c4] sm:$0xff]
    %v431 = vld [vmem:[#allocation2 + $0x8cc] sm:$0xf]
    %v432 = vld [vmem:[#allocation2 + $0x8d0] sm:$0xff]
    %v433 = vld [vmem:[#allocation2 + $0x8d8] sm:$0xf]
    %v434 = vld [vmem:[#allocation2 + $0x8dc] sm:$0xff]
    %v435 = vld [vmem:[#allocation2 + $0x8e4] sm:$0xf]
    %v436 = vld [vmem:[#allocation2 + $0x8e8] sm:$0xff]
    %v437 = vld [vmem:[#allocation2 + $0x8f0] sm:$0xf]
    %v438 = vld [vmem:[#allocation2 + $0x8f4] sm:$0xff]
    %v439 = vld [vmem:[#allocation2 + $0x8fc] sm:$0xf]
    %v440 = vld [vmem:[#allocation4] sm:$0x7]
    %v442 = vperm.slane %v440, 0
    %v443 = vperm.slane %v440, 1
    %v444 = vperm.slane %v440, 2
    %v460 = vunpack.c.l.b16 %v44
    %v461 = vunpack.c.h.b16 %v44
    %v462 = vunpack.c.l.b16 %v45
    %v463 = vunpack.c.h.b16 %v45
    %v464 = vunpack.c.l.b16 %v46
    %v465 = vunpack.c.h.b16 %v46
    %v466 = vunpack.c.l.b16 %v47
    %v467 = vunpack.c.h.b16 %v47
    %v468 = vunpack.c.l.b16 %v48
    %v469 = vunpack.c.h.b16 %v48
    %v470 = vunpack.c.l.b16 %v49
    %v471 = vunpack.c.h.b16 %v49
    %v472 = vunpack.c.l.b16 %v50
    %v473 = vunpack.c.h.b16 %v50
    %v474 = vunpack.c.l.b16 %v51
    %v475 = vunpack.c.h.b16 %v51
    %v476 = vunpack.c.l.b16 %v52
    %v477 = vunpack.c.h.b16 %v52
    %v478 = vunpack.c.l.b16 %v53
    %v479 = vunpack.c.h.b16 %v53
    %v480 = vunpack.c.l.b16 %v54
    %v481 = vunpack.c.h.b16 %v54
    %v482 = vunpack.c.l.b16 %v55
    %v483 = vunpack.c.h.b16 %v55
    %v484 = vpack.c.b16 %v472, %v460
    %v485 = vpack.c.b16 %v473, %v461
    %v486 = vpack.c.b16 %v474, %v462
    %v487 = vpack.c.b16 %v475, %v463
    %v488 = vpack.c.b16 %v476, %v464
    %v489 = vpack.c.b16 %v477, %v465
    %v490 = vpack.c.b16 %v478, %v466
    %v491 = vpack.c.b16 %v479, %v467
    %v492 = vpack.c.b16 %v480, %v468
    %v493 = vpack.c.b16 %v481, %v469
    %v494 = vpack.c.b16 %v482, %v470
    %v495 = vpack.c.b16 %v483, %v471
    %v892 = vunpack.c.l.b16 %v56
    %v893 = vunpack.c.h.b16 %v56
    %v894 = vunpack.c.l.b16 %v57
    %v895 = vunpack.c.l.b16 %v58
    %v896 = vunpack.c.h.b16 %v58
    %v897 = vunpack.c.l.b16 %v59
    %v898 = vunpack.c.l.b16 %v60
    %v899 = vunpack.c.h.b16 %v60
    %v900 = vunpack.c.l.b16 %v61
    %v901 = vunpack.c.l.b16 %v62
    %v902 = vunpack.c.h.b16 %v62
    %v903 = vunpack.c.l.b16 %v63
    %v904 = vunpack.c.l.b16 %v64
    %v905 = vunpack.c.h.b16 %v64
    %v906 = vunpack.c.l.b16 %v65
    %v907 = vunpack.c.l.b16 %v66
    %v908 = vunpack.c.h.b16 %v66
    %v909 = vunpack.c.l.b16 %v67
    %v910 = vunpack.c.l.b16 %v68
    %v911 = vunpack.c.h.b16 %v68
    %v912 = vunpack.c.l.b16 %v69
    %v913 = vunpack.c.l.b16 %v70
    %v914 = vunpack.c.h.b16 %v70
    %v915 = vunpack.c.l.b16 %v71
    %v916 = vunpack.c.l.b16 %v72
    %v917 = vunpack.c.h.b16 %v72
    %v918 = vunpack.c.l.b16 %v73
    %v919 = vunpack.c.l.b16 %v74
    %v920 = vunpack.c.h.b16 %v74
    %v921 = vunpack.c.l.b16 %v75
    %v922 = vunpack.c.l.b16 %v76
    %v923 = vunpack.c.h.b16 %v76
    %v924 = vunpack.c.l.b16 %v77
    %v925 = vunpack.c.l.b16 %v78
    %v926 = vunpack.c.h.b16 %v78
    %v927 = vunpack.c.l.b16 %v79
    %v928 = vunpack.c.l.b16 %v80
    %v929 = vunpack.c.h.b16 %v80
    %v930 = vunpack.c.l.b16 %v81
    %v931 = vunpack.c.l.b16 %v82
    %v932 = vunpack.c.h.b16 %v82
    %v933 = vunpack.c.l.b16 %v83
    %v934 = vunpack.c.l.b16 %v84
    %v935 = vunpack.c.h.b16 %v84
    %v936 = vunpack.c.l.b16 %v85
    %v937 = vunpack.c.l.b16 %v86
    %v938 = vunpack.c.h.b16 %v86
    %v939 = vunpack.c.l.b16 %v87
    %v940 = vunpack.c.l.b16 %v88
    %v941 = vunpack.c.h.b16 %v88
    %v942 = vunpack.c.l.b16 %v89
    %v943 = vunpack.c.l.b16 %v90
    %v944 = vunpack.c.h.b16 %v90
    %v945 = vunpack.c.l.b16 %v91
    %v946 = vunpack.c.l.b16 %v92
    %v947 = vunpack.c.h.b16 %v92
    %v948 = vunpack.c.l.b16 %v93
    %v949 = vunpack.c.l.b16 %v94
    %v950 = vunpack.c.h.b16 %v94
    %v951 = vunpack.c.l.b16 %v95
    %v952 = vunpack.c.l.b16 %v96
    %v953 = vunpack.c.h.b16 %v96
    %v954 = vunpack.c.l.b16 %v97
    %v955 = vunpack.c.l.b16 %v98
    %v956 = vunpack.c.h.b16 %v98
    %v957 = vunpack.c.l.b16 %v99
    %v958 = vunpack.c.l.b16 %v100
    %v959 = vunpack.c.h.b16 %v100
    %v960 = vunpack.c.l.b16 %v101
    %v961 = vunpack.c.l.b16 %v102
    %v962 = vunpack.c.h.b16 %v102
    %v963 = vunpack.c.l.b16 %v103
    %v964 = vunpack.c.l.b16 %v104
    %v965 = vunpack.c.h.b16 %v104
    %v966 = vunpack.c.l.b16 %v105
    %v967 = vunpack.c.l.b16 %v106
    %v968 = vunpack.c.h.b16 %v106
    %v969 = vunpack.c.l.b16 %v107
    %v970 = vunpack.c.l.b16 %v108
    %v971 = vunpack.c.h.b16 %v108
    %v972 = vunpack.c.l.b16 %v109
    %v973 = vunpack.c.l.b16 %v110
    %v974 = vunpack.c.h.b16 %v110
    %v975 = vunpack.c.l.b16 %v111
    %v976 = vunpack.c.l.b16 %v112
    %v977 = vunpack.c.h.b16 %v112
    %v978 = vunpack.c.l.b16 %v113
    %v979 = vunpack.c.l.b16 %v114
    %v980 = vunpack.c.h.b16 %v114
    %v981 = vunpack.c.l.b16 %v115
    %v982 = vunpack.c.l.b16 %v116
    %v983 = vunpack.c.h.b16 %v116
    %v984 = vunpack.c.l.b16 %v117
    %v985 = vunpack.c.l.b16 %v118
    %v986 = vunpack.c.h.b16 %v118
    %v987 = vunpack.c.l.b16 %v119
    %v988 = vunpack.c.l.b16 %v120
    %v989 = vunpack.c.h.b16 %v120
    %v990 = vunpack.c.l.b16 %v121
    %v991 = vunpack.c.l.b16 %v122
    %v992 = vunpack.c.h.b16 %v122
    %v993 = vunpack.c.l.b16 %v123
    %v994 = vunpack.c.l.b16 %v124
    %v995 = vunpack.c.h.b16 %v124
    %v996 = vunpack.c.l.b16 %v125
    %v997 = vunpack.c.l.b16 %v126
    %v998 = vunpack.c.h.b16 %v126
    %v999 = vunpack.c.l.b16 %v127
    %v1000 = vunpack.c.l.b16 %v128
    %v1001 = vunpack.c.h.b16 %v128
    %v1002 = vunpack.c.l.b16 %v129
    %v1003 = vunpack.c.l.b16 %v130
    %v1004 = vunpack.c.h.b16 %v130
    %v1005 = vunpack.c.l.b16 %v131
    %v1006 = vunpack.c.l.b16 %v132
    %v1007 = vunpack.c.h.b16 %v132
    %v1008 = vunpack.c.l.b16 %v133
    %v1009 = vunpack.c.l.b16 %v134
    %v1010 = vunpack.c.h.b16 %v134
    %v1011 = vunpack.c.l.b16 %v135
    %v1012 = vunpack.c.l.b16 %v136
    %v1013 = vunpack.c.h.b16 %v136
    %v1014 = vunpack.c.l.b16 %v137
    %v1015 = vunpack.c.l.b16 %v138
    %v1016 = vunpack.c.h.b16 %v138
    %v1017 = vunpack.c.l.b16 %v139
    %v1018 = vunpack.c.l.b16 %v140
    %v1019 = vunpack.c.h.b16 %v140
    %v1020 = vunpack.c.l.b16 %v141
    %v1021 = vunpack.c.l.b16 %v142
    %v1022 = vunpack.c.h.b16 %v142
    %v1023 = vunpack.c.l.b16 %v143
    %v1024 = vunpack.c.l.b16 %v144
    %v1025 = vunpack.c.h.b16 %v144
    %v1026 = vunpack.c.l.b16 %v145
    %v1027 = vunpack.c.l.b16 %v146
    %v1028 = vunpack.c.h.b16 %v146
    %v1029 = vunpack.c.l.b16 %v147
    %v1030 = vunpack.c.l.b16 %v148
    %v1031 = vunpack.c.h.b16 %v148
    %v1032 = vunpack.c.l.b16 %v149
    %v1033 = vunpack.c.l.b16 %v150
    %v1034 = vunpack.c.h.b16 %v150
    %v1035 = vunpack.c.l.b16 %v151
    %v1036 = vunpack.c.l.b16 %v152
    %v1037 = vunpack.c.h.b16 %v152
    %v1038 = vunpack.c.l.b16 %v153
    %v1039 = vunpack.c.l.b16 %v154
    %v1040 = vunpack.c.h.b16 %v154
    %v1041 = vunpack.c.l.b16 %v155
    %v1042 = vunpack.c.l.b16 %v156
    %v1043 = vunpack.c.h.b16 %v156
    %v1044 = vunpack.c.l.b16 %v157
    %v1045 = vunpack.c.l.b16 %v158
    %v1046 = vunpack.c.h.b16 %v158
    %v1047 = vunpack.c.l.b16 %v159
    %v1048 = vunpack.c.l.b16 %v160
    %v1049 = vunpack.c.h.b16 %v160
    %v1050 = vunpack.c.l.b16 %v161
    %v1051 = vunpack.c.l.b16 %v162
    %v1052 = vunpack.c.h.b16 %v162
    %v1053 = vunpack.c.l.b16 %v163
    %v1054 = vunpack.c.l.b16 %v164
    %v1055 = vunpack.c.h.b16 %v164
    %v1056 = vunpack.c.l.b16 %v165
    %v1057 = vunpack.c.l.b16 %v166
    %v1058 = vunpack.c.h.b16 %v166
    %v1059 = vunpack.c.l.b16 %v167
    %v1060 = vunpack.c.l.b16 %v168
    %v1061 = vunpack.c.h.b16 %v168
    %v1062 = vunpack.c.l.b16 %v169
    %v1063 = vunpack.c.l.b16 %v170
    %v1064 = vunpack.c.h.b16 %v170
    %v1065 = vunpack.c.l.b16 %v171
    %v1066 = vunpack.c.l.b16 %v172
    %v1067 = vunpack.c.h.b16 %v172
    %v1068 = vunpack.c.l.b16 %v173
    %v1069 = vunpack.c.l.b16 %v174
    %v1070 = vunpack.c.h.b16 %v174
    %v1071 = vunpack.c.l.b16 %v175
    %v1072 = vunpack.c.l.b16 %v176
    %v1073 = vunpack.c.h.b16 %v176
    %v1074 = vunpack.c.l.b16 %v177
    %v1075 = vunpack.c.l.b16 %v178
    %v1076 = vunpack.c.h.b16 %v178
    %v1077 = vunpack.c.l.b16 %v179
    %v1078 = vunpack.c.l.b16 %v180
    %v1079 = vunpack.c.h.b16 %v180
    %v1080 = vunpack.c.l.b16 %v181
    %v1081 = vunpack.c.l.b16 %v182
    %v1082 = vunpack.c.h.b16 %v182
    %v1083 = vunpack.c.l.b16 %v183
    %v1084 = vunpack.c.l.b16 %v184
    %v1085 = vunpack.c.h.b16 %v184
    %v1086 = vunpack.c.l.b16 %v185
    %v1087 = vunpack.c.l.b16 %v186
    %v1088 = vunpack.c.h.b16 %v186
    %v1089 = vunpack.c.l.b16 %v187
    %v1090 = vunpack.c.l.b16 %v188
    %v1091 = vunpack.c.h.b16 %v188
    %v1092 = vunpack.c.l.b16 %v189
    %v1093 = vunpack.c.l.b16 %v190
    %v1094 = vunpack.c.h.b16 %v190
    %v1095 = vunpack.c.l.b16 %v191
    %v1096 = vunpack.c.l.b16 %v192
    %v1097 = vunpack.c.h.b16 %v192
    %v1098 = vunpack.c.l.b16 %v193
    %v1099 = vunpack.c.l.b16 %v194
    %v1100 = vunpack.c.h.b16 %v194
    %v1101 = vunpack.c.l.b16 %v195
    %v1102 = vunpack.c.l.b16 %v196
    %v1103 = vunpack.c.h.b16 %v196
    %v1104 = vunpack.c.l.b16 %v197
    %v1105 = vunpack.c.l.b16 %v198
    %v1106 = vunpack.c.h.b16 %v198
    %v1107 = vunpack.c.l.b16 %v199
    %v1108 = vunpack.c.l.b16 %v200
    %v1109 = vunpack.c.h.b16 %v200
    %v1110 = vunpack.c.l.b16 %v201
    %v1111 = vunpack.c.l.b16 %v202
    %v1112 = vunpack.c.h.b16 %v202
    %v1113 = vunpack.c.l.b16 %v203
    %v1114 = vunpack.c.l.b16 %v204
    %v1115 = vunpack.c.h.b16 %v204
    %v1116 = vunpack.c.l.b16 %v205
    %v1117 = vunpack.c.l.b16 %v206
    %v1118 = vunpack.c.h.b16 %v206
    %v1119 = vunpack.c.l.b16 %v207
    %v1120 = vunpack.c.l.b16 %v208
    %v1121 = vunpack.c.h.b16 %v208
    %v1122 = vunpack.c.l.b16 %v209
    %v1123 = vunpack.c.l.b16 %v210
    %v1124 = vunpack.c.h.b16 %v210
    %v1125 = vunpack.c.l.b16 %v211
    %v1126 = vunpack.c.l.b16 %v212
    %v1127 = vunpack.c.h.b16 %v212
    %v1128 = vunpack.c.l.b16 %v213
    %v1129 = vunpack.c.l.b16 %v214
    %v1130 = vunpack.c.h.b16 %v214
    %v1131 = vunpack.c.l.b16 %v215
    %v1132 = vunpack.c.l.b16 %v216
    %v1133 = vunpack.c.h.b16 %v216
    %v1134 = vunpack.c.l.b16 %v217
    %v1135 = vunpack.c.l.b16 %v218
    %v1136 = vunpack.c.h.b16 %v218
    %v1137 = vunpack.c.l.b16 %v219
    %v1138 = vunpack.c.l.b16 %v220
    %v1139 = vunpack.c.h.b16 %v220
    %v1140 = vunpack.c.l.b16 %v221
    %v1141 = vunpack.c.l.b16 %v222
    %v1142 = vunpack.c.h.b16 %v222
    %v1143 = vunpack.c.l.b16 %v223
    %v1144 = vunpack.c.l.b16 %v224
    %v1145 = vunpack.c.h.b16 %v224
    %v1146 = vunpack.c.l.b16 %v225
    %v1147 = vunpack.c.l.b16 %v226
    %v1148 = vunpack.c.h.b16 %v226
    %v1149 = vunpack.c.l.b16 %v227
    %v1150 = vunpack.c.l.b16 %v228
    %v1151 = vunpack.c.h.b16 %v228
    %v1152 = vunpack.c.l.b16 %v229
    %v1153 = vunpack.c.l.b16 %v230
    %v1154 = vunpack.c.h.b16 %v230
    %v1155 = vunpack.c.l.b16 %v231
    %v1156 = vunpack.c.l.b16 %v232
    %v1157 = vunpack.c.h.b16 %v232
    %v1158 = vunpack.c.l.b16 %v233
    %v1159 = vunpack.c.l.b16 %v234
    %v1160 = vunpack.c.h.b16 %v234
    %v1161 = vunpack.c.l.b16 %v235
    %v1162 = vunpack.c.l.b16 %v236
    %v1163 = vunpack.c.h.b16 %v236
    %v1164 = vunpack.c.l.b16 %v237
    %v1165 = vunpack.c.l.b16 %v238
    %v1166 = vunpack.c.h.b16 %v238
    %v1167 = vunpack.c.l.b16 %v239
    %v1168 = vunpack.c.l.b16 %v240
    %v1169 = vunpack.c.h.b16 %v240
    %v1170 = vunpack.c.l.b16 %v241
    %v1171 = vunpack.c.l.b16 %v242
    %v1172 = vunpack.c.h.b16 %v242
    %v1173 = vunpack.c.l.b16 %v243
    %v1174 = vunpack.c.l.b16 %v244
    %v1175 = vunpack.c.h.b16 %v244
    %v1176 = vunpack.c.l.b16 %v245
    %v1177 = vunpack.c.l.b16 %v246
    %v1178 = vunpack.c.h.b16 %v246
    %v1179 = vunpack.c.l.b16 %v247
    %v1180 = vunpack.c.l.b16 %v248
    %v1181 = vunpack.c.h.b16 %v248
    %v1182 = vunpack.c.l.b16 %v249
    %v1183 = vunpack.c.l.b16 %v250
    %v1184 = vunpack.c.h.b16 %v250
    %v1185 = vunpack.c.l.b16 %v251
    %v1186 = vunpack.c.l.b16 %v252
    %v1187 = vunpack.c.h.b16 %v252
    %v1188 = vunpack.c.l.b16 %v253
    %v1189 = vunpack.c.l.b16 %v254
    %v1190 = vunpack.c.h.b16 %v254
    %v1191 = vunpack.c.l.b16 %v255
    %v1192 = vunpack.c.l.b16 %v256
    %v1193 = vunpack.c.h.b16 %v256
    %v1194 = vunpack.c.l.b16 %v257
    %v1195 = vunpack.c.l.b16 %v258
    %v1196 = vunpack.c.h.b16 %v258
    %v1197 = vunpack.c.l.b16 %v259
    %v1198 = vunpack.c.l.b16 %v260
    %v1199 = vunpack.c.h.b16 %v260
    %v1200 = vunpack.c.l.b16 %v261
    %v1201 = vunpack.c.l.b16 %v262
    %v1202 = vunpack.c.h.b16 %v262
    %v1203 = vunpack.c.l.b16 %v263
    %v1204 = vunpack.c.l.b16 %v264
    %v1205 = vunpack.c.h.b16 %v264
    %v1206 = vunpack.c.l.b16 %v265
    %v1207 = vunpack.c.l.b16 %v266
    %v1208 = vunpack.c.h.b16 %v266
    %v1209 = vunpack.c.l.b16 %v267
    %v1210 = vunpack.c.l.b16 %v268
    %v1211 = vunpack.c.h.b16 %v268
    %v1212 = vunpack.c.l.b16 %v269
    %v1213 = vunpack.c.l.b16 %v270
    %v1214 = vunpack.c.h.b16 %v270
    %v1215 = vunpack.c.l.b16 %v271
    %v1216 = vunpack.c.l.b16 %v272
    %v1217 = vunpack.c.h.b16 %v272
    %v1218 = vunpack.c.l.b16 %v273
    %v1219 = vunpack.c.l.b16 %v274
    %v1220 = vunpack.c.h.b16 %v274
    %v1221 = vunpack.c.l.b16 %v275
    %v1222 = vunpack.c.l.b16 %v276
    %v1223 = vunpack.c.h.b16 %v276
    %v1224 = vunpack.c.l.b16 %v277
    %v1225 = vunpack.c.l.b16 %v278
    %v1226 = vunpack.c.h.b16 %v278
    %v1227 = vunpack.c.l.b16 %v279
    %v1228 = vunpack.c.l.b16 %v280
    %v1229 = vunpack.c.h.b16 %v280
    %v1230 = vunpack.c.l.b16 %v281
    %v1231 = vunpack.c.l.b16 %v282
    %v1232 = vunpack.c.h.b16 %v282
    %v1233 = vunpack.c.l.b16 %v283
    %v1234 = vunpack.c.l.b16 %v284
    %v1235 = vunpack.c.h.b16 %v284
    %v1236 = vunpack.c.l.b16 %v285
    %v1237 = vunpack.c.l.b16 %v286
    %v1238 = vunpack.c.h.b16 %v286
    %v1239 = vunpack.c.l.b16 %v287
    %v1240 = vunpack.c.l.b16 %v288
    %v1241 = vunpack.c.h.b16 %v288
    %v1242 = vunpack.c.l.b16 %v289
    %v1243 = vunpack.c.l.b16 %v290
    %v1244 = vunpack.c.h.b16 %v290
    %v1245 = vunpack.c.l.b16 %v291
    %v1246 = vunpack.c.l.b16 %v292
    %v1247 = vunpack.c.h.b16 %v292
    %v1248 = vunpack.c.l.b16 %v293
    %v1249 = vunpack.c.l.b16 %v294
    %v1250 = vunpack.c.h.b16 %v294
    %v1251 = vunpack.c.l.b16 %v295
    %v1252 = vunpack.c.l.b16 %v296
    %v1253 = vunpack.c.h.b16 %v296
    %v1254 = vunpack.c.l.b16 %v297
    %v1255 = vunpack.c.l.b16 %v298
    %v1256 = vunpack.c.h.b16 %v298
    %v1257 = vunpack.c.l.b16 %v299
    %v1258 = vunpack.c.l.b16 %v300
    %v1259 = vunpack.c.h.b16 %v300
    %v1260 = vunpack.c.l.b16 %v301
    %v1261 = vunpack.c.l.b16 %v302
    %v1262 = vunpack.c.h.b16 %v302
    %v1263 = vunpack.c.l.b16 %v303
    %v1264 = vunpack.c.l.b16 %v304
    %v1265 = vunpack.c.h.b16 %v304
    %v1266 = vunpack.c.l.b16 %v305
    %v1267 = vunpack.c.l.b16 %v306
    %v1268 = vunpack.c.h.b16 %v306
    %v1269 = vunpack.c.l.b16 %v307
    %v1270 = vunpack.c.l.b16 %v308
    %v1271 = vunpack.c.h.b16 %v308
    %v1272 = vunpack.c.l.b16 %v309
    %v1273 = vunpack.c.l.b16 %v310
    %v1274 = vunpack.c.h.b16 %v310
    %v1275 = vunpack.c.l.b16 %v311
    %v1276 = vunpack.c.l.b16 %v312
    %v1277 = vunpack.c.h.b16 %v312
    %v1278 = vunpack.c.l.b16 %v313
    %v1279 = vunpack.c.l.b16 %v314
    %v1280 = vunpack.c.h.b16 %v314
    %v1281 = vunpack.c.l.b16 %v315
    %v1282 = vunpack.c.l.b16 %v316
    %v1283 = vunpack.c.h.b16 %v316
    %v1284 = vunpack.c.l.b16 %v317
    %v1285 = vunpack.c.l.b16 %v318
    %v1286 = vunpack.c.h.b16 %v318
    %v1287 = vunpack.c.l.b16 %v319
    %v1288 = vunpack.c.l.b16 %v320
    %v1289 = vunpack.c.h.b16 %v320
    %v1290 = vunpack.c.l.b16 %v321
    %v1291 = vunpack.c.l.b16 %v322
    %v1292 = vunpack.c.h.b16 %v322
    %v1293 = vunpack.c.l.b16 %v323
    %v1294 = vunpack.c.l.b16 %v324
    %v1295 = vunpack.c.h.b16 %v324
    %v1296 = vunpack.c.l.b16 %v325
    %v1297 = vunpack.c.l.b16 %v326
    %v1298 = vunpack.c.h.b16 %v326
    %v1299 = vunpack.c.l.b16 %v327
    %v1300 = vunpack.c.l.b16 %v328
    %v1301 = vunpack.c.h.b16 %v328
    %v1302 = vunpack.c.l.b16 %v329
    %v1303 = vunpack.c.l.b16 %v330
    %v1304 = vunpack.c.h.b16 %v330
    %v1305 = vunpack.c.l.b16 %v331
    %v1306 = vunpack.c.l.b16 %v332
    %v1307 = vunpack.c.h.b16 %v332
    %v1308 = vunpack.c.l.b16 %v333
    %v1309 = vunpack.c.l.b16 %v334
    %v1310 = vunpack.c.h.b16 %v334
    %v1311 = vunpack.c.l.b16 %v335
    %v1312 = vunpack.c.l.b16 %v336
    %v1313 = vunpack.c.h.b16 %v336
    %v1314 = vunpack.c.l.b16 %v337
    %v1315 = vunpack.c.l.b16 %v338
    %v1316 = vunpack.c.h.b16 %v338
    %v1317 = vunpack.c.l.b16 %v339
    %v1318 = vunpack.c.l.b16 %v340
    %v1319 = vunpack.c.h.b16 %v340
    %v1320 = vunpack.c.l.b16 %v341
    %v1321 = vunpack.c.l.b16 %v342
    %v1322 = vunpack.c.h.b16 %v342
    %v1323 = vunpack.c.l.b16 %v343
    %v1324 = vunpack.c.l.b16 %v344
    %v1325 = vunpack.c.h.b16 %v344
    %v1326 = vunpack.c.l.b16 %v345
    %v1327 = vunpack.c.l.b16 %v346
    %v1328 = vunpack.c.h.b16 %v346
    %v1329 = vunpack.c.l.b16 %v347
    %v1330 = vunpack.c.l.b16 %v348
    %v1331 = vunpack.c.h.b16 %v348
    %v1332 = vunpack.c.l.b16 %v349
    %v1333 = vunpack.c.l.b16 %v350
    %v1334 = vunpack.c.h.b16 %v350
    %v1335 = vunpack.c.l.b16 %v351
    %v1336 = vunpack.c.l.b16 %v352
    %v1337 = vunpack.c.h.b16 %v352
    %v1338 = vunpack.c.l.b16 %v353
    %v1339 = vunpack.c.l.b16 %v354
    %v1340 = vunpack.c.h.b16 %v354
    %v1341 = vunpack.c.l.b16 %v355
    %v1342 = vunpack.c.l.b16 %v356
    %v1343 = vunpack.c.h.b16 %v356
    %v1344 = vunpack.c.l.b16 %v357
    %v1345 = vunpack.c.l.b16 %v358
    %v1346 = vunpack.c.h.b16 %v358
    %v1347 = vunpack.c.l.b16 %v359
    %v1348 = vunpack.c.l.b16 %v360
    %v1349 = vunpack.c.h.b16 %v360
    %v1350 = vunpack.c.l.b16 %v361
    %v1351 = vunpack.c.l.b16 %v362
    %v1352 = vunpack.c.h.b16 %v362
    %v1353 = vunpack.c.l.b16 %v363
    %v1354 = vunpack.c.l.b16 %v364
    %v1355 = vunpack.c.h.b16 %v364
    %v1356 = vunpack.c.l.b16 %v365
    %v1357 = vunpack.c.l.b16 %v366
    %v1358 = vunpack.c.h.b16 %v366
    %v1359 = vunpack.c.l.b16 %v367
    %v1360 = vunpack.c.l.b16 %v368
    %v1361 = vunpack.c.h.b16 %v368
    %v1362 = vunpack.c.l.b16 %v369
    %v1363 = vunpack.c.l.b16 %v370
    %v1364 = vunpack.c.h.b16 %v370
    %v1365 = vunpack.c.l.b16 %v371
    %v1366 = vunpack.c.l.b16 %v372
    %v1367 = vunpack.c.h.b16 %v372
    %v1368 = vunpack.c.l.b16 %v373
    %v1369 = vunpack.c.l.b16 %v374
    %v1370 = vunpack.c.h.b16 %v374
    %v1371 = vunpack.c.l.b16 %v375
    %v1372 = vunpack.c.l.b16 %v376
    %v1373 = vunpack.c.h.b16 %v376
    %v1374 = vunpack.c.l.b16 %v377
    %v1375 = vunpack.c.l.b16 %v378
    %v1376 = vunpack.c.h.b16 %v378
    %v1377 = vunpack.c.l.b16 %v379
    %v1378 = vunpack.c.l.b16 %v380
    %v1379 = vunpack.c.h.b16 %v380
    %v1380 = vunpack.c.l.b16 %v381
    %v1381 = vunpack.c.l.b16 %v382
    %v1382 = vunpack.c.h.b16 %v382
    %v1383 = vunpack.c.l.b16 %v383
    %v1384 = vunpack.c.l.b16 %v384
    %v1385 = vunpack.c.h.b16 %v384
    %v1386 = vunpack.c.l.b16 %v385
    %v1387 = vunpack.c.l.b16 %v386
    %v1388 = vunpack.c.h.b16 %v386
    %v1389 = vunpack.c.l.b16 %v387
    %v1390 = vunpack.c.l.b16 %v388
    %v1391 = vunpack.c.h.b16 %v388
    %v1392 = vunpack.c.l.b16 %v389
    %v1393 = vunpack.c.l.b16 %v390
    %v1394 = vunpack.c.h.b16 %v390
    %v1395 = vunpack.c.l.b16 %v391
    %v1396 = vunpack.c.l.b16 %v392
    %v1397 = vunpack.c.h.b16 %v392
    %v1398 = vunpack.c.l.b16 %v393
    %v1399 = vunpack.c.l.b16 %v394
    %v1400 = vunpack.c.h.b16 %v394
    %v1401 = vunpack.c.l.b16 %v395
    %v1402 = vunpack.c.l.b16 %v396
    %v1403 = vunpack.c.h.b16 %v396
    %v1404 = vunpack.c.l.b16 %v397
    %v1405 = vunpack.c.l.b16 %v398
    %v1406 = vunpack.c.h.b16 %v398
    %v1407 = vunpack.c.l.b16 %v399
    %v1408 = vunpack.c.l.b16 %v400
    %v1409 = vunpack.c.h.b16 %v400
    %v1410 = vunpack.c.l.b16 %v401
    %v1411 = vunpack.c.l.b16 %v402
    %v1412 = vunpack.c.h.b16 %v402
    %v1413 = vunpack.c.l.b16 %v403
    %v1414 = vunpack.c.l.b16 %v404
    %v1415 = vunpack.c.h.b16 %v404
    %v1416 = vunpack.c.l.b16 %v405
    %v1417 = vunpack.c.l.b16 %v406
    %v1418 = vunpack.c.h.b16 %v406
    %v1419 = vunpack.c.l.b16 %v407
    %v1420 = vunpack.c.l.b16 %v408
    %v1421 = vunpack.c.h.b16 %v408
    %v1422 = vunpack.c.l.b16 %v409
    %v1423 = vunpack.c.l.b16 %v410
    %v1424 = vunpack.c.h.b16 %v410
    %v1425 = vunpack.c.l.b16 %v411
    %v1426 = vunpack.c.l.b16 %v412
    %v1427 = vunpack.c.h.b16 %v412
    %v1428 = vunpack.c.l.b16 %v413
    %v1429 = vunpack.c.l.b16 %v414
    %v1430 = vunpack.c.h.b16 %v414
    %v1431 = vunpack.c.l.b16 %v415
    %v1432 = vunpack.c.l.b16 %v416
    %v1433 = vunpack.c.h.b16 %v416
    %v1434 = vunpack.c.l.b16 %v417
    %v1435 = vunpack.c.l.b16 %v418
    %v1436 = vunpack.c.h.b16 %v418
    %v1437 = vunpack.c.l.b16 %v419
    %v1438 = vunpack.c.l.b16 %v420
    %v1439 = vunpack.c.h.b16 %v420
    %v1440 = vunpack.c.l.b16 %v421
    %v1441 = vunpack.c.l.b16 %v422
    %v1442 = vunpack.c.h.b16 %v422
    %v1443 = vunpack.c.l.b16 %v423
    %v1444 = vunpack.c.l.b16 %v424
    %v1445 = vunpack.c.h.b16 %v424
    %v1446 = vunpack.c.l.b16 %v425
    %v1447 = vunpack.c.l.b16 %v426
    %v1448 = vunpack.c.h.b16 %v426
    %v1449 = vunpack.c.l.b16 %v427
    %v1450 = vunpack.c.l.b16 %v428
    %v1451 = vunpack.c.h.b16 %v428
    %v1452 = vunpack.c.l.b16 %v429
    %v1453 = vunpack.c.l.b16 %v430
    %v1454 = vunpack.c.h.b16 %v430
    %v1455 = vunpack.c.l.b16 %v431
    %v1456 = vunpack.c.l.b16 %v432
    %v1457 = vunpack.c.h.b16 %v432
    %v1458 = vunpack.c.l.b16 %v433
    %v1459 = vunpack.c.l.b16 %v434
    %v1460 = vunpack.c.h.b16 %v434
    %v1461 = vunpack.c.l.b16 %v435
    %v1462 = vunpack.c.l.b16 %v436
    %v1463 = vunpack.c.h.b16 %v436
    %v1464 = vunpack.c.l.b16 %v437
    %v1465 = vunpack.c.l.b16 %v438
    %v1466 = vunpack.c.h.b16 %v438
    %v1467 = vunpack.c.l.b16 %v439
    %v1468 = vpack.c.b16 %v895, %v892
    %v1469 = vpack.c.b16 %v896, %v893
    %v1470 = vpack.c.b16 %v897, %v894
    %v1471 = vpack.c.b16 %v901, %v898
    %v1472 = vpack.c.b16 %v902, %v899
    %v1473 = vpack.c.b16 %v903, %v900
    %v1474 = vpack.c.b16 %v907, %v904
    %v1475 = vpack.c.b16 %v908, %v905
    %v1476 = vpack.c.b16 %v909, %v906
    %v1477 = vpack.c.b16 %v913, %v910
    %v1478 = vpack.c.b16 %v914, %v911
    %v1479 = vpack.c.b16 %v915, %v912
    %v1480 = vpack.c.b16 %v919, %v916
    %v1481 = vpack.c.b16 %v920, %v917
    %v1482 = vpack.c.b16 %v921, %v918
    %v1483 = vpack.c.b16 %v925, %v922
    %v1484 = vpack.c.b16 %v926, %v923
    %v1485 = vpack.c.b16 %v927, %v924
    %v1486 = vpack.c.b16 %v931, %v928
    %v1487 = vpack.c.b16 %v932, %v929
    %v1488 = vpack.c.b16 %v933, %v930
    %v1489 = vpack.c.b16 %v937, %v934
    %v1490 = vpack.c.b16 %v938, %v935
    %v1491 = vpack.c.b16 %v939, %v936
    %v1492 = vpack.c.b16 %v943, %v940
    %v1493 = vpack.c.b16 %v944, %v941
    %v1494 = vpack.c.b16 %v945, %v942
    %v1495 = vpack.c.b16 %v949, %v946
    %v1496 = vpack.c.b16 %v950, %v947
    %v1497 = vpack.c.b16 %v951, %v948
    %v1498 = vpack.c.b16 %v955, %v952
    %v1499 = vpack.c.b16 %v956, %v953
    %v1500 = vpack.c.b16 %v957, %v954
    %v1501 = vpack.c.b16 %v961, %v958
    %v1502 = vpack.c.b16 %v962, %v959
    %v1503 = vpack.c.b16 %v963, %v960
    %v1504 = vpack.c.b16 %v967, %v964
    %v1505 = vpack.c.b16 %v968, %v965
    %v1506 = vpack.c.b16 %v969, %v966
    %v1507 = vpack.c.b16 %v973, %v970
    %v1508 = vpack.c.b16 %v974, %v971
    %v1509 = vpack.c.b16 %v975, %v972
    %v1510 = vpack.c.b16 %v979, %v976
    %v1511 = vpack.c.b16 %v980, %v977
    %v1512 = vpack.c.b16 %v981, %v978
    %v1513 = vpack.c.b16 %v985, %v982
    %v1514 = vpack.c.b16 %v986, %v983
    %v1515 = vpack.c.b16 %v987, %v984
    %v1516 = vpack.c.b16 %v991, %v988
    %v1517 = vpack.c.b16 %v992, %v989
    %v1518 = vpack.c.b16 %v993, %v990
    %v1519 = vpack.c.b16 %v997, %v994
    %v1520 = vpack.c.b16 %v998, %v995
    %v1521 = vpack.c.b16 %v999, %v996
    %v1522 = vpack.c.b16 %v1003, %v1000
    %v1523 = vpack.c.b16 %v1004, %v1001
    %v1524 = vpack.c.b16 %v1005, %v1002
    %v1525 = vpack.c.b16 %v1009, %v1006
    %v1526 = vpack.c.b16 %v1010, %v1007
    %v1527 = vpack.c.b16 %v1011, %v1008
    %v1528 = vpack.c.b16 %v1015, %v1012
    %v1529 = vpack.c.b16 %v1016, %v1013
    %v1530 = vpack.c.b16 %v1017, %v1014
    %v1531 = vpack.c.b16 %v1021, %v1018
    %v1532 = vpack.c.b16 %v1022, %v1019
    %v1533 = vpack.c.b16 %v1023, %v1020
    %v1534 = vpack.c.b16 %v1027, %v1024
    %v1535 = vpack.c.b16 %v1028, %v1025
    %v1536 = vpack.c.b16 %v1029, %v1026
    %v1537 = vpack.c.b16 %v1033, %v1030
    %v1538 = vpack.c.b16 %v1034, %v1031
    %v1539 = vpack.c.b16 %v1035, %v1032
    %v1540 = vpack.c.b16 %v1039, %v1036
    %v1541 = vpack.c.b16 %v1040, %v1037
    %v1542 = vpack.c.b16 %v1041, %v1038
    %v1543 = vpack.c.b16 %v1045, %v1042
    %v1544 = vpack.c.b16 %v1046, %v1043
    %v1545 = vpack.c.b16 %v1047, %v1044
    %v1546 = vpack.c.b16 %v1051, %v1048
    %v1547 = vpack.c.b16 %v1052, %v1049
    %v1548 = vpack.c.b16 %v1053, %v1050
    %v1549 = vpack.c.b16 %v1057, %v1054
    %v1550 = vpack.c.b16 %v1058, %v1055
    %v1551 = vpack.c.b16 %v1059, %v1056
    %v1552 = vpack.c.b16 %v1063, %v1060
    %v1553 = vpack.c.b16 %v1064, %v1061
    %v1554 = vpack.c.b16 %v1065, %v1062
    %v1555 = vpack.c.b16 %v1069, %v1066
    %v1556 = vpack.c.b16 %v1070, %v1067
    %v1557 = vpack.c.b16 %v1071, %v1068
    %v1558 = vpack.c.b16 %v1075, %v1072
    %v1559 = vpack.c.b16 %v1076, %v1073
    %v1560 = vpack.c.b16 %v1077, %v1074
    %v1561 = vpack.c.b16 %v1081, %v1078
    %v1562 = vpack.c.b16 %v1082, %v1079
    %v1563 = vpack.c.b16 %v1083, %v1080
    %v1564 = vpack.c.b16 %v1087, %v1084
    %v1565 = vpack.c.b16 %v1088, %v1085
    %v1566 = vpack.c.b16 %v1089, %v1086
    %v1567 = vpack.c.b16 %v1093, %v1090
    %v1568 = vpack.c.b16 %v1094, %v1091
    %v1569 = vpack.c.b16 %v1095, %v1092
    %v1570 = vpack.c.b16 %v1099, %v1096
    %v1571 = vpack.c.b16 %v1100, %v1097
    %v1572 = vpack.c.b16 %v1101, %v1098
    %v1573 = vpack.c.b16 %v1105, %v1102
    %v1574 = vpack.c.b16 %v1106, %v1103
    %v1575 = vpack.c.b16 %v1107, %v1104
    %v1576 = vpack.c.b16 %v1111, %v1108
    %v1577 = vpack.c.b16 %v1112, %v1109
    %v1578 = vpack.c.b16 %v1113, %v1110
    %v1579 = vpack.c.b16 %v1117, %v1114
    %v1580 = vpack.c.b16 %v1118, %v1115
    %v1581 = vpack.c.b16 %v1119, %v1116
    %v1582 = vpack.c.b16 %v1123, %v1120
    %v1583 = vpack.c.b16 %v1124, %v1121
    %v1584 = vpack.c.b16 %v1125, %v1122
    %v1585 = vpack.c.b16 %v1129, %v1126
    %v1586 = vpack.c.b16 %v1130, %v1127
    %v1587 = vpack.c.b16 %v1131, %v1128
    %v1588 = vpack.c.b16 %v1135, %v1132
    %v1589 = vpack.c.b16 %v1136, %v1133
    %v1590 = vpack.c.b16 %v1137, %v1134
    %v1591 = vpack.c.b16 %v1141, %v1138
    %v1592 = vpack.c.b16 %v1142, %v1139
    %v1593 = vpack.c.b16 %v1143, %v1140
    %v1594 = vpack.c.b16 %v1147, %v1144
    %v1595 = vpack.c.b16 %v1148, %v1145
    %v1596 = vpack.c.b16 %v1149, %v1146
    %v1597 = vpack.c.b16 %v1153, %v1150
    %v1598 = vpack.c.b16 %v1154, %v1151
    %v1599 = vpack.c.b16 %v1155, %v1152
    %v1600 = vpack.c.b16 %v1159, %v1156
    %v1601 = vpack.c.b16 %v1160, %v1157
    %v1602 = vpack.c.b16 %v1161, %v1158
    %v1603 = vpack.c.b16 %v1165, %v1162
    %v1604 = vpack.c.b16 %v1166, %v1163
    %v1605 = vpack.c.b16 %v1167, %v1164
    %v1606 = vpack.c.b16 %v1171, %v1168
    %v1607 = vpack.c.b16 %v1172, %v1169
    %v1608 = vpack.c.b16 %v1173, %v1170
    %v1609 = vpack.c.b16 %v1177, %v1174
    %v1610 = vpack.c.b16 %v1178, %v1175
    %v1611 = vpack.c.b16 %v1179, %v1176
    %v1612 = vpack.c.b16 %v1183, %v1180
    %v1613 = vpack.c.b16 %v1184, %v1181
    %v1614 = vpack.c.b16 %v1185, %v1182
    %v1615 = vpack.c.b16 %v1189, %v1186
    %v1616 = vpack.c.b16 %v1190, %v1187
    %v1617 = vpack.c.b16 %v1191, %v1188
    %v1618 = vpack.c.b16 %v1195, %v1192
    %v1619 = vpack.c.b16 %v1196, %v1193
    %v1620 = vpack.c.b16 %v1197, %v1194
    %v1621 = vpack.c.b16 %v1201, %v1198
    %v1622 = vpack.c.b16 %v1202, %v1199
    %v1623 = vpack.c.b16 %v1203, %v1200
    %v1624 = vpack.c.b16 %v1207, %v1204
    %v1625 = vpack.c.b16 %v1208, %v1205
    %v1626 = vpack.c.b16 %v1209, %v1206
    %v1627 = vpack.c.b16 %v1213, %v1210
    %v1628 = vpack.c.b16 %v1214, %v1211
    %v1629 = vpack.c.b16 %v1215, %v1212
    %v1630 = vpack.c.b16 %v1219, %v1216
    %v1631 = vpack.c.b16 %v1220, %v1217
    %v1632 = vpack.c.b16 %v1221, %v1218
    %v1633 = vpack.c.b16 %v1225, %v1222
    %v1634 = vpack.c.b16 %v1226, %v1223
    %v1635 = vpack.c.b16 %v1227, %v1224
    %v1636 = vpack.c.b16 %v1231, %v1228
    %v1637 = vpack.c.b16 %v1232, %v1229
    %v1638 = vpack.c.b16 %v1233, %v1230
    %v1639 = vpack.c.b16 %v1237, %v1234
    %v1640 = vpack.c.b16 %v1238, %v1235
    %v1641 = vpack.c.b16 %v1239, %v1236
    %v1642 = vpack.c.b16 %v1243, %v1240
    %v1643 = vpack.c.b16 %v1244, %v1241
    %v1644 = vpack.c.b16 %v1245, %v1242
    %v1645 = vpack.c.b16 %v1249, %v1246
    %v1646 = vpack.c.b16 %v1250, %v1247
    %v1647 = vpack.c.b16 %v1251, %v1248
    %v1648 = vpack.c.b16 %v1255, %v1252
    %v1649 = vpack.c.b16 %v1256, %v1253
    %v1650 = vpack.c.b16 %v1257, %v1254
    %v1651 = vpack.c.b16 %v1261, %v1258
    %v1652 = vpack.c.b16 %v1262, %v1259
    %v1653 = vpack.c.b16 %v1263, %v1260
    %v1654 = vpack.c.b16 %v1267, %v1264
    %v1655 = vpack.c.b16 %v1268, %v1265
    %v1656 = vpack.c.b16 %v1269, %v1266
    %v1657 = vpack.c.b16 %v1273, %v1270
    %v1658 = vpack.c.b16 %v1274, %v1271
    %v1659 = vpack.c.b16 %v1275, %v1272
    %v1660 = vpack.c.b16 %v1279, %v1276
    %v1661 = vpack.c.b16 %v1280, %v1277
    %v1662 = vpack.c.b16 %v1281, %v1278
    %v1663 = vpack.c.b16 %v1285, %v1282
    %v1664 = vpack.c.b16 %v1286, %v1283
    %v1665 = vpack.c.b16 %v1287, %v1284
    %v1666 = vpack.c.b16 %v1291, %v1288
    %v1667 = vpack.c.b16 %v1292, %v1289
    %v1668 = vpack.c.b16 %v1293, %v1290
    %v1669 = vpack.c.b16 %v1297, %v1294
    %v1670 = vpack.c.b16 %v1298, %v1295
    %v1671 = vpack.c.b16 %v1299, %v1296
    %v1672 = vpack.c.b16 %v1303, %v1300
    %v1673 = vpack.c.b16 %v1304, %v1301
    %v1674 = vpack.c.b16 %v1305, %v1302
    %v1675 = vpack.c.b16 %v1309, %v1306
    %v1676 = vpack.c.b16 %v1310, %v1307
    %v1677 = vpack.c.b16 %v1311, %v1308
    %v1678 = vpack.c.b16 %v1315, %v1312
    %v1679 = vpack.c.b16 %v1316, %v1313
    %v1680 = vpack.c.b16 %v1317, %v1314
    %v1681 = vpack.c.b16 %v1321, %v1318
    %v1682 = vpack.c.b16 %v1322, %v1319
    %v1683 = vpack.c.b16 %v1323, %v1320
    %v1684 = vpack.c.b16 %v1327, %v1324
    %v1685 = vpack.c.b16 %v1328, %v1325
    %v1686 = vpack.c.b16 %v1329, %v1326
    %v1687 = vpack.c.b16 %v1333, %v1330
    %v1688 = vpack.c.b16 %v1334, %v1331
    %v1689 = vpack.c.b16 %v1335, %v1332
    %v1690 = vpack.c.b16 %v1339, %v1336
    %v1691 = vpack.c.b16 %v1340, %v1337
    %v1692 = vpack.c.b16 %v1341, %v1338
    %v1693 = vpack.c.b16 %v1345, %v1342
    %v1694 = vpack.c.b16 %v1346, %v1343
    %v1695 = vpack.c.b16 %v1347, %v1344
    %v1696 = vpack.c.b16 %v1351, %v1348
    %v1697 = vpack.c.b16 %v1352, %v1349
    %v1698 = vpack.c.b16 %v1353, %v1350
    %v1699 = vpack.c.b16 %v1357, %v1354
    %v1700 = vpack.c.b16 %v1358, %v1355
    %v1701 = vpack.c.b16 %v1359, %v1356
    %v1702 = vpack.c.b16 %v1363, %v1360
    %v1703 = vpack.c.b16 %v1364, %v1361
    %v1704 = vpack.c.b16 %v1365, %v1362
    %v1705 = vpack.c.b16 %v1369, %v1366
    %v1706 = vpack.c.b16 %v1370, %v1367
    %v1707 = vpack.c.b16 %v1371, %v1368
    %v1708 = vpack.c.b16 %v1375, %v1372
    %v1709 = vpack.c.b16 %v1376, %v1373
    %v1710 = vpack.c.b16 %v1377, %v1374
    %v1711 = vpack.c.b16 %v1381, %v1378
    %v1712 = vpack.c.b16 %v1382, %v1379
    %v1713 = vpack.c.b16 %v1383, %v1380
    %v1714 = vpack.c.b16 %v1387, %v1384
    %v1715 = vpack.c.b16 %v1388, %v1385
    %v1716 = vpack.c.b16 %v1389, %v1386
    %v1717 = vpack.c.b16 %v1393, %v1390
    %v1718 = vpack.c.b16 %v1394, %v1391
    %v1719 = vpack.c.b16 %v1395, %v1392
    %v1720 = vpack.c.b16 %v1399, %v1396
    %v1721 = vpack.c.b16 %v1400, %v1397
    %v1722 = vpack.c.b16 %v1401, %v1398
    %v1723 = vpack.c.b16 %v1405, %v1402
    %v1724 = vpack.c.b16 %v1406, %v1403
    %v1725 = vpack.c.b16 %v1407, %v1404
    %v1726 = vpack.c.b16 %v1411, %v1408
    %v1727 = vpack.c.b16 %v1412, %v1409
    %v1728 = vpack.c.b16 %v1413, %v1410
    %v1729 = vpack.c.b16 %v1417, %v1414
    %v1730 = vpack.c.b16 %v1418, %v1415
    %v1731 = vpack.c.b16 %v1419, %v1416
    %v1732 = vpack.c.b16 %v1423, %v1420
    %v1733 = vpack.c.b16 %v1424, %v1421
    %v1734 = vpack.c.b16 %v1425, %v1422
    %v1735 = vpack.c.b16 %v1429, %v1426
    %v1736 = vpack.c.b16 %v1430, %v1427
    %v1737 = vpack.c.b16 %v1431, %v1428
    %v1738 = vpack.c.b16 %v1435, %v1432
    %v1739 = vpack.c.b16 %v1436, %v1433
    %v1740 = vpack.c.b16 %v1437, %v1434
    %v1741 = vpack.c.b16 %v1441, %v1438
    %v1742 = vpack.c.b16 %v1442, %v1439
    %v1743 = vpack.c.b16 %v1443, %v1440
    %v1744 = vpack.c.b16 %v1447, %v1444
    %v1745 = vpack.c.b16 %v1448, %v1445
    %v1746 = vpack.c.b16 %v1449, %v1446
    %v1747 = vpack.c.b16 %v1453, %v1450
    %v1748 = vpack.c.b16 %v1454, %v1451
    %v1749 = vpack.c.b16 %v1455, %v1452
    %v1750 = vpack.c.b16 %v1459, %v1456
    %v1751 = vpack.c.b16 %v1460, %v1457
    %v1752 = vpack.c.b16 %v1461, %v1458
    %v1753 = vpack.c.b16 %v1465, %v1462
    %v1754 = vpack.c.b16 %v1466, %v1463
    %v1755 = vpack.c.b16 %v1467, %v1464
    %2044 = vmatpush.bf16.msra.mxu0 %v1489
    %2045 = vmatpush.bf16.msra.mxu0 %v1486
    %2046 = vmatpush.bf16.msra.mxu0 %v1483
    %2047 = vmatpush.bf16.msra.mxu0 %v1480
    %2048 = vmatpush.bf16.msra.mxu0 %v1477
    %2049 = vmatpush.bf16.msra.mxu0 %v1474
    %2050 = vmatpush.bf16.msra.mxu0 %v1471
    %2051 = vmatpush.bf16.msra.mxu0 %v1468
    %2052 = vmatmul.bf16.gmra.mxu0 %v484
    %v2053 = vpop.f32.mrf.mxu0
    %v2054 = vadd.f32 %v442, %v2053
    %v2055 = vpop.f32.mrf.mxu0
    %v2056 = vadd.f32 %v442, %v2055
    %2057 = vdwg.mxu0
    %2058 = vmatpush.bf16.msra.mxu0 %v1513
    %2059 = vmatpush.bf16.msra.mxu0 %v1510
    %2060 = vmatpush.bf16.msra.mxu0 %v1507
    %2061 = vmatpush.bf16.msra.mxu0 %v1504
    %2062 = vmatpush.bf16.msra.mxu0 %v1501
    %2063 = vmatpush.bf16.msra.mxu0 %v1498
    %2064 = vmatpush.bf16.msra.mxu0 %v1495
    %2065 = vmatpush.bf16.msra.mxu0 %v1492
    %2066 = vmatmul.bf16.gmra.mxu0 %v485
    %v2067 = vpop.f32.mrf.mxu0
    %v2068 = vadd.f32 %v2054, %v2067
    %v2069 = vpop.f32.mrf.mxu0
    %v2070 = vadd.f32 %v2056, %v2069
    %2071 = vdwg.mxu0
    %2072 = vmatpush.bf16.msra.mxu0 %v1537
    %2073 = vmatpush.bf16.msra.mxu0 %v1534
    %2074 = vmatpush.bf16.msra.mxu0 %v1531
    %2075 = vmatpush.bf16.msra.mxu0 %v1528
    %2076 = vmatpush.bf16.msra.mxu0 %v1525
    %2077 = vmatpush.bf16.msra.mxu0 %v1522
    %2078 = vmatpush.bf16.msra.mxu0 %v1519
    %2079 = vmatpush.bf16.msra.mxu0 %v1516
    %2080 = vmatmul.bf16.gmra.mxu0 %v486
    %v2081 = vpop.f32.mrf.mxu0
    %v2082 = vadd.f32 %v2068, %v2081
    %v2083 = vpop.f32.mrf.mxu0
    %v2084 = vadd.f32 %v2070, %v2083
    %2085 = vdwg.mxu0
    %2086 = vmatpush.bf16.msra.mxu0 %v1561
    %2087 = vmatpush.bf16.msra.mxu0 %v1558
    %2088 = vmatpush.bf16.msra.mxu0 %v1555
    %2089 = vmatpush.bf16.msra.mxu0 %v1552
    %2090 = vmatpush.bf16.msra.mxu0 %v1549
    %2091 = vmatpush.bf16.msra.mxu0 %v1546
    %2092 = vmatpush.bf16.msra.mxu0 %v1543
    %2093 = vmatpush.bf16.msra.mxu0 %v1540
    %2094 = vmatmul.bf16.gmra.mxu0 %v487
    %v2095 = vpop.f32.mrf.mxu0
    %v2096 = vadd.f32 %v2082, %v2095
    %v2097 = vpop.f32.mrf.mxu0
    %v2098 = vadd.f32 %v2084, %v2097
    %2099 = vdwg.mxu0
    %2100 = vmatpush.bf16.msra.mxu0 %v1585
    %2101 = vmatpush.bf16.msra.mxu0 %v1582
    %2102 = vmatpush.bf16.msra.mxu0 %v1579
    %2103 = vmatpush.bf16.msra.mxu0 %v1576
    %2104 = vmatpush.bf16.msra.mxu0 %v1573
    %2105 = vmatpush.bf16.msra.mxu0 %v1570
    %2106 = vmatpush.bf16.msra.mxu0 %v1567
    %2107 = vmatpush.bf16.msra.mxu0 %v1564
    %2108 = vmatmul.bf16.gmra.mxu0 %v488
    %v2109 = vpop.f32.mrf.mxu0
    %v2110 = vadd.f32 %v2096, %v2109
    %v2111 = vpop.f32.mrf.mxu0
    %v2112 = vadd.f32 %v2098, %v2111
    %2113 = vdwg.mxu0
    %2114 = vmatpush.bf16.msra.mxu0 %v1609
    %2115 = vmatpush.bf16.msra.mxu0 %v1606
    %2116 = vmatpush.bf16.msra.mxu0 %v1603
    %2117 = vmatpush.bf16.msra.mxu0 %v1600
    %2118 = vmatpush.bf16.msra.mxu0 %v1597
    %2119 = vmatpush.bf16.msra.mxu0 %v1594
    %2120 = vmatpush.bf16.msra.mxu0 %v1591
    %2121 = vmatpush.bf16.msra.mxu0 %v1588
    %2122 = vmatmul.bf16.gmra.mxu0 %v489
    %v2123 = vpop.f32.mrf.mxu0
    %v2124 = vadd.f32 %v2110, %v2123
    %v2125 = vpop.f32.mrf.mxu0
    %v2126 = vadd.f32 %v2112, %v2125
    %2127 = vdwg.mxu0
    %2128 = vmatpush.bf16.msra.mxu0 %v1633
    %2129 = vmatpush.bf16.msra.mxu0 %v1630
    %2130 = vmatpush.bf16.msra.mxu0 %v1627
    %2131 = vmatpush.bf16.msra.mxu0 %v1624
    %2132 = vmatpush.bf16.msra.mxu0 %v1621
    %2133 = vmatpush.bf16.msra.mxu0 %v1618
    %2134 = vmatpush.bf16.msra.mxu0 %v1615
    %2135 = vmatpush.bf16.msra.mxu0 %v1612
    %2136 = vmatmul.bf16.gmra.mxu0 %v490
    %v2137 = vpop.f32.mrf.mxu0
    %v2138 = vadd.f32 %v2124, %v2137
    %v2139 = vpop.f32.mrf.mxu0
    %v2140 = vadd.f32 %v2126, %v2139
    %2141 = vdwg.mxu0
    %2142 = vmatpush.bf16.msra.mxu0 %v1657
    %2143 = vmatpush.bf16.msra.mxu0 %v1654
    %2144 = vmatpush.bf16.msra.mxu0 %v1651
    %2145 = vmatpush.bf16.msra.mxu0 %v1648
    %2146 = vmatpush.bf16.msra.mxu0 %v1645
    %2147 = vmatpush.bf16.msra.mxu0 %v1642
    %2148 = vmatpush.bf16.msra.mxu0 %v1639
    %2149 = vmatpush.bf16.msra.mxu0 %v1636
    %2150 = vmatmul.bf16.gmra.mxu0 %v491
    %v2151 = vpop.f32.mrf.mxu0
    %v2152 = vadd.f32 %v2138, %v2151
    %v2153 = vpop.f32.mrf.mxu0
    %v2154 = vadd.f32 %v2140, %v2153
    %2155 = vdwg.mxu0
    %2156 = vmatpush.bf16.msra.mxu0 %v1681
    %2157 = vmatpush.bf16.msra.mxu0 %v1678
    %2158 = vmatpush.bf16.msra.mxu0 %v1675
    %2159 = vmatpush.bf16.msra.mxu0 %v1672
    %2160 = vmatpush.bf16.msra.mxu0 %v1669
    %2161 = vmatpush.bf16.msra.mxu0 %v1666
    %2162 = vmatpush.bf16.msra.mxu0 %v1663
    %2163 = vmatpush.bf16.msra.mxu0 %v1660
    %2164 = vmatmul.bf16.gmra.mxu0 %v492
    %v2165 = vpop.f32.mrf.mxu0
    %v2166 = vadd.f32 %v2152, %v2165
    %v2167 = vpop.f32.mrf.mxu0
    %v2168 = vadd.f32 %v2154, %v2167
    %2169 = vdwg.mxu0
    %2170 = vmatpush.bf16.msra.mxu0 %v1705
    %2171 = vmatpush.bf16.msra.mxu0 %v1702
    %2172 = vmatpush.bf16.msra.mxu0 %v1699
    %2173 = vmatpush.bf16.msra.mxu0 %v1696
    %2174 = vmatpush.bf16.msra.mxu0 %v1693
    %2175 = vmatpush.bf16.msra.mxu0 %v1690
    %2176 = vmatpush.bf16.msra.mxu0 %v1687
    %2177 = vmatpush.bf16.msra.mxu0 %v1684
    %2178 = vmatmul.bf16.gmra.mxu0 %v493
    %v2179 = vpop.f32.mrf.mxu0
    %v2180 = vadd.f32 %v2166, %v2179
    %v2181 = vpop.f32.mrf.mxu0
    %v2182 = vadd.f32 %v2168, %v2181
    %2183 = vdwg.mxu0
    %2184 = vmatpush.bf16.msra.mxu0 %v1729
    %2185 = vmatpush.bf16.msra.mxu0 %v1726
    %2186 = vmatpush.bf16.msra.mxu0 %v1723
    %2187 = vmatpush.bf16.msra.mxu0 %v1720
    %2188 = vmatpush.bf16.msra.mxu0 %v1717
    %2189 = vmatpush.bf16.msra.mxu0 %v1714
    %2190 = vmatpush.bf16.msra.mxu0 %v1711
    %2191 = vmatpush.bf16.msra.mxu0 %v1708
    %2192 = vmatmul.bf16.gmra.mxu0 %v494
    %v2193 = vpop.f32.mrf.mxu0
    %v2194 = vadd.f32 %v2180, %v2193
    %v2195 = vpop.f32.mrf.mxu0
    %v2196 = vadd.f32 %v2182, %v2195
    %2197 = vdwg.mxu0
    %2198 = vmatpush.bf16.msra.mxu0 %v1753
    %2199 = vmatpush.bf16.msra.mxu0 %v1750
    %2200 = vmatpush.bf16.msra.mxu0 %v1747
    %2201 = vmatpush.bf16.msra.mxu0 %v1744
    %2202 = vmatpush.bf16.msra.mxu0 %v1741
    %2203 = vmatpush.bf16.msra.mxu0 %v1738
    %2204 = vmatpush.bf16.msra.mxu0 %v1735
    %2205 = vmatpush.bf16.msra.mxu0 %v1732
    %2206 = vmatmul.bf16.gmra.mxu0 %v495
    %v2207 = vpop.f32.mrf.mxu0
    %v2208 = vadd.f32 %v2194, %v2207
    %v2209 = vpop.f32.mrf.mxu0
    %v2210 = vadd.f32 %v2196, %v2209
    %2211 = vdwg.mxu0
    %2212 = vmatpush.bf16.msra.mxu0 %v1490
    %2213 = vmatpush.bf16.msra.mxu0 %v1487
    %2214 = vmatpush.bf16.msra.mxu0 %v1484
    %2215 = vmatpush.bf16.msra.mxu0 %v1481
    %2216 = vmatpush.bf16.msra.mxu0 %v1478
    %2217 = vmatpush.bf16.msra.mxu0 %v1475
    %2218 = vmatpush.bf16.msra.mxu0 %v1472
    %2219 = vmatpush.bf16.msra.mxu0 %v1469
    %2220 = vmatmul.bf16.gmra.mxu0 %v484
    %v2221 = vpop.f32.mrf.mxu0
    %v2222 = vadd.f32 %v443, %v2221
    %v2223 = vpop.f32.mrf.mxu0
    %v2224 = vadd.f32 %v443, %v2223
    %2225 = vdwg.mxu0
    %2226 = vmatpush.bf16.msra.mxu0 %v1514
    %2227 = vmatpush.bf16.msra.mxu0 %v1511
    %2228 = vmatpush.bf16.msra.mxu0 %v1508
    %2229 = vmatpush.bf16.msra.mxu0 %v1505
    %2230 = vmatpush.bf16.msra.mxu0 %v1502
    %2231 = vmatpush.bf16.msra.mxu0 %v1499
    %2232 = vmatpush.bf16.msra.mxu0 %v1496
    %2233 = vmatpush.bf16.msra.mxu0 %v1493
    %2234 = vmatmul.bf16.gmra.mxu0 %v485
    %v2235 = vpop.f32.mrf.mxu0
    %v2236 = vadd.f32 %v2222, %v2235
    %v2237 = vpop.f32.mrf.mxu0
    %v2238 = vadd.f32 %v2224, %v2237
    %2239 = vdwg.mxu0
    %2240 = vmatpush.bf16.msra.mxu0 %v1538
    %2241 = vmatpush.bf16.msra.mxu0 %v1535
    %2242 = vmatpush.bf16.msra.mxu0 %v1532
    %2243 = vmatpush.bf16.msra.mxu0 %v1529
    %2244 = vmatpush.bf16.msra.mxu0 %v1526
    %2245 = vmatpush.bf16.msra.mxu0 %v1523
    %2246 = vmatpush.bf16.msra.mxu0 %v1520
    %2247 = vmatpush.bf16.msra.mxu0 %v1517
    %2248 = vmatmul.bf16.gmra.mxu0 %v486
    %v2249 = vpop.f32.mrf.mxu0
    %v2250 = vadd.f32 %v2236, %v2249
    %v2251 = vpop.f32.mrf.mxu0
    %v2252 = vadd.f32 %v2238, %v2251
    %2253 = vdwg.mxu0
    %2254 = vmatpush.bf16.msra.mxu0 %v1562
    %2255 = vmatpush.bf16.msra.mxu0 %v1559
    %2256 = vmatpush.bf16.msra.mxu0 %v1556
    %2257 = vmatpush.bf16.msra.mxu0 %v1553
    %2258 = vmatpush.bf16.msra.mxu0 %v1550
    %2259 = vmatpush.bf16.msra.mxu0 %v1547
    %2260 = vmatpush.bf16.msra.mxu0 %v1544
    %2261 = vmatpush.bf16.msra.mxu0 %v1541
    %2262 = vmatmul.bf16.gmra.mxu0 %v487
    %v2263 = vpop.f32.mrf.mxu0
    %v2264 = vadd.f32 %v2250, %v2263
    %v2265 = vpop.f32.mrf.mxu0
    %v2266 = vadd.f32 %v2252, %v2265
    %2267 = vdwg.mxu0
    %2268 = vmatpush.bf16.msra.mxu0 %v1586
    %2269 = vmatpush.bf16.msra.mxu0 %v1583
    %2270 = vmatpush.bf16.msra.mxu0 %v1580
    %2271 = vmatpush.bf16.msra.mxu0 %v1577
    %2272 = vmatpush.bf16.msra.mxu0 %v1574
    %2273 = vmatpush.bf16.msra.mxu0 %v1571
    %2274 = vmatpush.bf16.msra.mxu0 %v1568
    %2275 = vmatpush.bf16.msra.mxu0 %v1565
    %2276 = vmatmul.bf16.gmra.mxu0 %v488
    %v2277 = vpop.f32.mrf.mxu0
    %v2278 = vadd.f32 %v2264, %v2277
    %v2279 = vpop.f32.mrf.mxu0
    %v2280 = vadd.f32 %v2266, %v2279
    %2281 = vdwg.mxu0
    %2282 = vmatpush.bf16.msra.mxu0 %v1610
    %2283 = vmatpush.bf16.msra.mxu0 %v1607
    %2284 = vmatpush.bf16.msra.mxu0 %v1604
    %2285 = vmatpush.bf16.msra.mxu0 %v1601
    %2286 = vmatpush.bf16.msra.mxu0 %v1598
    %2287 = vmatpush.bf16.msra.mxu0 %v1595
    %2288 = vmatpush.bf16.msra.mxu0 %v1592
    %2289 = vmatpush.bf16.msra.mxu0 %v1589
    %2290 = vmatmul.bf16.gmra.mxu0 %v489
    %v2291 = vpop.f32.mrf.mxu0
    %v2292 = vadd.f32 %v2278, %v2291
    %v2293 = vpop.f32.mrf.mxu0
    %v2294 = vadd.f32 %v2280, %v2293
    %2295 = vdwg.mxu0
    %2296 = vmatpush.bf16.msra.mxu0 %v1634
    %2297 = vmatpush.bf16.msra.mxu0 %v1631
    %2298 = vmatpush.bf16.msra.mxu0 %v1628
    %2299 = vmatpush.bf16.msra.mxu0 %v1625
    %2300 = vmatpush.bf16.msra.mxu0 %v1622
    %2301 = vmatpush.bf16.msra.mxu0 %v1619
    %2302 = vmatpush.bf16.msra.mxu0 %v1616
    %2303 = vmatpush.bf16.msra.mxu0 %v1613
    %2304 = vmatmul.bf16.gmra.mxu0 %v490
    %v2305 = vpop.f32.mrf.mxu0
    %v2306 = vadd.f32 %v2292, %v2305
    %v2307 = vpop.f32.mrf.mxu0
    %v2308 = vadd.f32 %v2294, %v2307
    %2309 = vdwg.mxu0
    %2310 = vmatpush.bf16.msra.mxu0 %v1658
    %2311 = vmatpush.bf16.msra.mxu0 %v1655
    %2312 = vmatpush.bf16.msra.mxu0 %v1652
    %2313 = vmatpush.bf16.msra.mxu0 %v1649
    %2314 = vmatpush.bf16.msra.mxu0 %v1646
    %2315 = vmatpush.bf16.msra.mxu0 %v1643
    %2316 = vmatpush.bf16.msra.mxu0 %v1640
    %2317 = vmatpush.bf16.msra.mxu0 %v1637
    %2318 = vmatmul.bf16.gmra.mxu0 %v491
    %v2319 = vpop.f32.mrf.mxu0
    %v2320 = vadd.f32 %v2306, %v2319
    %v2321 = vpop.f32.mrf.mxu0
    %v2322 = vadd.f32 %v2308, %v2321
    %2323 = vdwg.mxu0
    %2324 = vmatpush.bf16.msra.mxu0 %v1682
    %2325 = vmatpush.bf16.msra.mxu0 %v1679
    %2326 = vmatpush.bf16.msra.mxu0 %v1676
    %2327 = vmatpush.bf16.msra.mxu0 %v1673
    %2328 = vmatpush.bf16.msra.mxu0 %v1670
    %2329 = vmatpush.bf16.msra.mxu0 %v1667
    %2330 = vmatpush.bf16.msra.mxu0 %v1664
    %2331 = vmatpush.bf16.msra.mxu0 %v1661
    %2332 = vmatmul.bf16.gmra.mxu0 %v492
    %v2333 = vpop.f32.mrf.mxu0
    %v2334 = vadd.f32 %v2320, %v2333
    %v2335 = vpop.f32.mrf.mxu0
    %v2336 = vadd.f32 %v2322, %v2335
    %2337 = vdwg.mxu0
    %2338 = vmatpush.bf16.msra.mxu0 %v1706
    %2339 = vmatpush.bf16.msra.mxu0 %v1703
    %2340 = vmatpush.bf16.msra.mxu0 %v1700
    %2341 = vmatpush.bf16.msra.mxu0 %v1697
    %2342 = vmatpush.bf16.msra.mxu0 %v1694
    %2343 = vmatpush.bf16.msra.mxu0 %v1691
    %2344 = vmatpush.bf16.msra.mxu0 %v1688
    %2345 = vmatpush.bf16.msra.mxu0 %v1685
    %2346 = vmatmul.bf16.gmra.mxu0 %v493
    %v2347 = vpop.f32.mrf.mxu0
    %v2348 = vadd.f32 %v2334, %v2347
    %v2349 = vpop.f32.mrf.mxu0
    %v2350 = vadd.f32 %v2336, %v2349
    %2351 = vdwg.mxu0
    %2352 = vmatpush.bf16.msra.mxu0 %v1730
    %2353 = vmatpush.bf16.msra.mxu0 %v1727
    %2354 = vmatpush.bf16.msra.mxu0 %v1724
    %2355 = vmatpush.bf16.msra.mxu0 %v1721
    %2356 = vmatpush.bf16.msra.mxu0 %v1718
    %2357 = vmatpush.bf16.msra.mxu0 %v1715
    %2358 = vmatpush.bf16.msra.mxu0 %v1712
    %2359 = vmatpush.bf16.msra.mxu0 %v1709
    %2360 = vmatmul.bf16.gmra.mxu0 %v494
    %v2361 = vpop.f32.mrf.mxu0
    %v2362 = vadd.f32 %v2348, %v2361
    %v2363 = vpop.f32.mrf.mxu0
    %v2364 = vadd.f32 %v2350, %v2363
    %2365 = vdwg.mxu0
    %2366 = vmatpush.bf16.msra.mxu0 %v1754
    %2367 = vmatpush.bf16.msra.mxu0 %v1751
    %2368 = vmatpush.bf16.msra.mxu0 %v1748
    %2369 = vmatpush.bf16.msra.mxu0 %v1745
    %2370 = vmatpush.bf16.msra.mxu0 %v1742
    %2371 = vmatpush.bf16.msra.mxu0 %v1739
    %2372 = vmatpush.bf16.msra.mxu0 %v1736
    %2373 = vmatpush.bf16.msra.mxu0 %v1733
    %2374 = vmatmul.bf16.gmra.mxu0 %v495
    %v2375 = vpop.f32.mrf.mxu0
    %v2376 = vadd.f32 %v2362, %v2375
    %v2377 = vpop.f32.mrf.mxu0
    %v2378 = vadd.f32 %v2364, %v2377
    %2379 = vdwg.mxu0
    %2380 = vmatpush.bf16.msra.mxu0 %v1491
    %2381 = vmatpush.bf16.msra.mxu0 %v1488
    %2382 = vmatpush.bf16.msra.mxu0 %v1485
    %2383 = vmatpush.bf16.msra.mxu0 %v1482
    %2384 = vmatpush.bf16.msra.mxu0 %v1479
    %2385 = vmatpush.bf16.msra.mxu0 %v1476
    %2386 = vmatpush.bf16.msra.mxu0 %v1473
    %2387 = vmatpush.bf16.msra.mxu0 %v1470
    %2388 = vmatmul.bf16.gmra.mxu0 %v484
    %v2389 = vpop.f32.mrf.mxu0
    %v2390 = vadd.f32 %v444, %v2389
    %v2391 = vpop.f32.mrf.mxu0
    %v2392 = vadd.f32 %v444, %v2391
    %2393 = vdwg.mxu0
    %2394 = vmatpush.bf16.msra.mxu0 %v1515
    %2395 = vmatpush.bf16.msra.mxu0 %v1512
    %2396 = vmatpush.bf16.msra.mxu0 %v1509
    %2397 = vmatpush.bf16.msra.mxu0 %v1506
    %2398 = vmatpush.bf16.msra.mxu0 %v1503
    %2399 = vmatpush.bf16.msra.mxu0 %v1500
    %2400 = vmatpush.bf16.msra.mxu0 %v1497
    %2401 = vmatpush.bf16.msra.mxu0 %v1494
    %2402 = vmatmul.bf16.gmra.mxu0 %v485
    %v2403 = vpop.f32.mrf.mxu0
    %v2404 = vadd.f32 %v2390, %v2403
    %v2405 = vpop.f32.mrf.mxu0
    %v2406 = vadd.f32 %v2392, %v2405
    %2407 = vdwg.mxu0
    %2408 = vmatpush.bf16.msra.mxu0 %v1539
    %2409 = vmatpush.bf16.msra.mxu0 %v1536
    %2410 = vmatpush.bf16.msra.mxu0 %v1533
    %2411 = vmatpush.bf16.msra.mxu0 %v1530
    %2412 = vmatpush.bf16.msra.mxu0 %v1527
    %2413 = vmatpush.bf16.msra.mxu0 %v1524
    %2414 = vmatpush.bf16.msra.mxu0 %v1521
    %2415 = vmatpush.bf16.msra.mxu0 %v1518
    %2416 = vmatmul.bf16.gmra.mxu0 %v486
    %v2417 = vpop.f32.mrf.mxu0
    %v2418 = vadd.f32 %v2404, %v2417
    %v2419 = vpop.f32.mrf.mxu0
    %v2420 = vadd.f32 %v2406, %v2419
    %2421 = vdwg.mxu0
    %2422 = vmatpush.bf16.msra.mxu0 %v1563
    %2423 = vmatpush.bf16.msra.mxu0 %v1560
    %2424 = vmatpush.bf16.msra.mxu0 %v1557
    %2425 = vmatpush.bf16.msra.mxu0 %v1554
    %2426 = vmatpush.bf16.msra.mxu0 %v1551
    %2427 = vmatpush.bf16.msra.mxu0 %v1548
    %2428 = vmatpush.bf16.msra.mxu0 %v1545
    %2429 = vmatpush.bf16.msra.mxu0 %v1542
    %2430 = vmatmul.bf16.gmra.mxu0 %v487
    %v2431 = vpop.f32.mrf.mxu0
    %v2432 = vadd.f32 %v2418, %v2431
    %v2433 = vpop.f32.mrf.mxu0
    %v2434 = vadd.f32 %v2420, %v2433
    %2435 = vdwg.mxu0
    %2436 = vmatpush.bf16.msra.mxu0 %v1587
    %2437 = vmatpush.bf16.msra.mxu0 %v1584
    %2438 = vmatpush.bf16.msra.mxu0 %v1581
    %2439 = vmatpush.bf16.msra.mxu0 %v1578
    %2440 = vmatpush.bf16.msra.mxu0 %v1575
    %2441 = vmatpush.bf16.msra.mxu0 %v1572
    %2442 = vmatpush.bf16.msra.mxu0 %v1569
    %2443 = vmatpush.bf16.msra.mxu0 %v1566
    %2444 = vmatmul.bf16.gmra.mxu0 %v488
    %v2445 = vpop.f32.mrf.mxu0
    %v2446 = vadd.f32 %v2432, %v2445
    %v2447 = vpop.f32.mrf.mxu0
    %v2448 = vadd.f32 %v2434, %v2447
    %2449 = vdwg.mxu0
    %2450 = vmatpush.bf16.msra.mxu0 %v1611
    %2451 = vmatpush.bf16.msra.mxu0 %v1608
    %2452 = vmatpush.bf16.msra.mxu0 %v1605
    %2453 = vmatpush.bf16.msra.mxu0 %v1602
    %2454 = vmatpush.bf16.msra.mxu0 %v1599
    %2455 = vmatpush.bf16.msra.mxu0 %v1596
    %2456 = vmatpush.bf16.msra.mxu0 %v1593
    %2457 = vmatpush.bf16.msra.mxu0 %v1590
    %2458 = vmatmul.bf16.gmra.mxu0 %v489
    %v2459 = vpop.f32.mrf.mxu0
    %v2460 = vadd.f32 %v2446, %v2459
    %v2461 = vpop.f32.mrf.mxu0
    %v2462 = vadd.f32 %v2448, %v2461
    %2463 = vdwg.mxu0
    %2464 = vmatpush.bf16.msra.mxu0 %v1635
    %2465 = vmatpush.bf16.msra.mxu0 %v1632
    %2466 = vmatpush.bf16.msra.mxu0 %v1629
    %2467 = vmatpush.bf16.msra.mxu0 %v1626
    %2468 = vmatpush.bf16.msra.mxu0 %v1623
    %2469 = vmatpush.bf16.msra.mxu0 %v1620
    %2470 = vmatpush.bf16.msra.mxu0 %v1617
    %2471 = vmatpush.bf16.msra.mxu0 %v1614
    %2472 = vmatmul.bf16.gmra.mxu0 %v490
    %v2473 = vpop.f32.mrf.mxu0
    %v2474 = vadd.f32 %v2460, %v2473
    %v2475 = vpop.f32.mrf.mxu0
    %v2476 = vadd.f32 %v2462, %v2475
    %2477 = vdwg.mxu0
    %2478 = vmatpush.bf16.msra.mxu0 %v1659
    %2479 = vmatpush.bf16.msra.mxu0 %v1656
    %2480 = vmatpush.bf16.msra.mxu0 %v1653
    %2481 = vmatpush.bf16.msra.mxu0 %v1650
    %2482 = vmatpush.bf16.msra.mxu0 %v1647
    %2483 = vmatpush.bf16.msra.mxu0 %v1644
    %2484 = vmatpush.bf16.msra.mxu0 %v1641
    %2485 = vmatpush.bf16.msra.mxu0 %v1638
    %2486 = vmatmul.bf16.gmra.mxu0 %v491
    %v2487 = vpop.f32.mrf.mxu0
    %v2488 = vadd.f32 %v2474, %v2487
    %v2489 = vpop.f32.mrf.mxu0
    %v2490 = vadd.f32 %v2476, %v2489
    %2491 = vdwg.mxu0
    %2492 = vmatpush.bf16.msra.mxu0 %v1683
    %2493 = vmatpush.bf16.msra.mxu0 %v1680
    %2494 = vmatpush.bf16.msra.mxu0 %v1677
    %2495 = vmatpush.bf16.msra.mxu0 %v1674
    %2496 = vmatpush.bf16.msra.mxu0 %v1671
    %2497 = vmatpush.bf16.msra.mxu0 %v1668
    %2498 = vmatpush.bf16.msra.mxu0 %v1665
    %2499 = vmatpush.bf16.msra.mxu0 %v1662
    %2500 = vmatmul.bf16.gmra.mxu0 %v492
    %v2501 = vpop.f32.mrf.mxu0
    %v2502 = vadd.f32 %v2488, %v2501
    %v2503 = vpop.f32.mrf.mxu0
    %v2504 = vadd.f32 %v2490, %v2503
    %2505 = vdwg.mxu0
    %2506 = vmatpush.bf16.msra.mxu0 %v1707
    %2507 = vmatpush.bf16.msra.mxu0 %v1704
    %2508 = vmatpush.bf16.msra.mxu0 %v1701
    %2509 = vmatpush.bf16.msra.mxu0 %v1698
    %2510 = vmatpush.bf16.msra.mxu0 %v1695
    %2511 = vmatpush.bf16.msra.mxu0 %v1692
    %2512 = vmatpush.bf16.msra.mxu0 %v1689
    %2513 = vmatpush.bf16.msra.mxu0 %v1686
    %2514 = vmatmul.bf16.gmra.mxu0 %v493
    %v2515 = vpop.f32.mrf.mxu0
    %v2516 = vadd.f32 %v2502, %v2515
    %v2517 = vpop.f32.mrf.mxu0
    %v2518 = vadd.f32 %v2504, %v2517
    %2519 = vdwg.mxu0
    %2520 = vmatpush.bf16.msra.mxu0 %v1731
    %2521 = vmatpush.bf16.msra.mxu0 %v1728
    %2522 = vmatpush.bf16.msra.mxu0 %v1725
    %2523 = vmatpush.bf16.msra.mxu0 %v1722
    %2524 = vmatpush.bf16.msra.mxu0 %v1719
    %2525 = vmatpush.bf16.msra.mxu0 %v1716
    %2526 = vmatpush.bf16.msra.mxu0 %v1713
    %2527 = vmatpush.bf16.msra.mxu0 %v1710
    %2528 = vmatmul.bf16.gmra.mxu0 %v494
    %v2529 = vpop.f32.mrf.mxu0
    %v2530 = vadd.f32 %v2516, %v2529
    %v2531 = vpop.f32.mrf.mxu0
    %v2532 = vadd.f32 %v2518, %v2531
    %2533 = vdwg.mxu0
    %2534 = vmatpush.bf16.msra.mxu0 %v1755
    %2535 = vmatpush.bf16.msra.mxu0 %v1752
    %2536 = vmatpush.bf16.msra.mxu0 %v1749
    %2537 = vmatpush.bf16.msra.mxu0 %v1746
    %2538 = vmatpush.bf16.msra.mxu0 %v1743
    %2539 = vmatpush.bf16.msra.mxu0 %v1740
    %2540 = vmatpush.bf16.msra.mxu0 %v1737
    %2541 = vmatpush.bf16.msra.mxu0 %v1734
    %2542 = vmatmul.bf16.gmra.mxu0 %v495
    %v2543 = vpop.f32.mrf.mxu0
    %v2544 = vadd.f32 %v2530, %v2543
    %v2545 = vpop.f32.mrf.mxu0
    %v2546 = vadd.f32 %v2532, %v2545
    %2547 = vdwg.mxu0
    %v2548 = vmax.f32 %v2208, 0.0
    %v2549 = vmax.f32 %v2376, 0.0
    %v2550 = vmax.f32 %v2544, 0.0
    %v2551 = vmax.f32 %v2210, 0.0
    %v2552 = vmax.f32 %v2378, 0.0
    %v2553 = vmax.f32 %v2546, 0.0
    %v2554 = vpack.c.bf16 %v2549, %v2548
    %v2555 = vpack.c.bf16 %v2550, %v2550
    %v2556 = vpack.c.bf16 %v2552, %v2551
    %v2557 = vpack.c.bf16 %v2553, %v2553
    %2558 = vst [vmem:[%s3] sm:$0xff] %v2554
    %2559 = vst [vmem:[%s3 + $0x8] sm:$0xf] %v2555
    %2560 = vst [vmem:[%s3 + $0xc] sm:$0xff] %v2556
    %2561 = vst [vmem:[%s3 + $0x14] sm:$0xf] %v2557
    // Predicated region
    $region22: #{neural_language_model_forward.2} parent=1 // pred_check
      _
    $region23: #{neural_language_model_forward.2} parent=1 // pred_check_branch
      %2563 = sbr.rel (0) target = $region25
    $region24: #{neural_language_model_forward.2} parent=1 // pred_region
      _
    $region25: #{neural_language_model_forward.2} parent=1 // pred_fallthru
      _
    // Predicated region
    $region26: #{neural_language_model_forward.2} parent=1 // pred_check
      _
    $region27: #{neural_language_model_forward.2} parent=1 // pred_check_branch
      %2565 = sbr.rel (0) target = $region29
    $region28: #{neural_language_model_forward.2} parent=1 // pred_region
      _
    $region29: #{neural_language_model_forward.2} parent=1 // pred_fallthru
      _
    %2566 = vsyncpa [#allocation3], 1
    %2567 = vsyncpa [#allocation5], 1

</llo_original>
